<compile_context>
chip_gen: v7x
topology: tpu7x:2x2x1
jax: 0.10.0
libtpu: 0.0.40
codegen_flags: <defaults>
</compile_context>

<pallas_src>
import jax
import jax.numpy as jnp
import numpy as np
from jax import lax
from jax.experimental import pallas as pl
from jax.experimental.pallas import tpu as pltpu

NEG = -1e30        # "log zero" (finite Python float -> jaxpr literal, no capture)
MASK_VAL = -1e15   # matches masked_fill_ value in the module
GROUP = 8          # batches per grid step (one per sublane)


def _forward_sum_kernel(ql_smem, attn_ref, kl_ref, qlv_ref, out_ref, norm_ref):
    Tqp, G, Kpad = attn_ref.shape
    grp = pl.program_id(0)
    b0 = grp * G

    kl_vec = kl_ref[...]                         # (G, 1) int32  target lengths
    ql_vec = qlv_ref[...]                        # (G, 1) int32  input  lengths

    # ---- Phase 1: per-row masked log-softmax normalizer (vectorized) -------
    CH = 8
    kidx = lax.broadcasted_iota(jnp.int32, (CH, G, Kpad), 2)

    def ph1(c, carry):
        r0 = pl.multiple_of(c * CH, CH)
        x = attn_ref[pl.ds(r0, CH)]              # (CH, G, Kpad)
        xm = jnp.where(kidx > kl_vec, MASK_VAL, x)
        m = jnp.max(xm, axis=-1, keepdims=True)
        norm_ref[pl.ds(r0, CH)] = m + jnp.log(
            jnp.sum(jnp.exp(xm - m), axis=-1, keepdims=True))
        return carry

    lax.fori_loop(0, Tqp // CH, ph1, 0)

    # ---- Phase 2: CTC forward (alpha) recursion, 8 batches per sublane -----
    lane = lax.broadcasted_iota(jnp.int32, (1, Kpad), 1)

    def lse2(a, b):
        return jnp.maximum(a, b) + jnp.log(1.0 + jnp.exp(-jnp.abs(a - b)))

    def lse3(a, b, c):
        m = jnp.maximum(jnp.maximum(a, b), c)
        return m + jnp.log(jnp.exp(a - m) + jnp.exp(b - m) + jnp.exp(c - m))

    def shift1(v):
        # [v0 .. vK] -> [NEG, v0 .. v_{K-1}] along lanes (XLU roll).
        return jnp.where(lane == 0, NEG, pltpu.roll(v, shift=1, axis=1))

    # a_blk[:, j] = alpha(blank after j labels); a_lab[:, j] = alpha(label j).
    e0 = attn_ref[0] - norm_ref[0]               # (G, Kpad) log-probs at t=0
    a_blk0 = jnp.where(lane == 0, e0, NEG)
    a_lab0 = jnp.where(lane == 1, e0, NEG)

    # dynamic per-group loop bound from scalar-prefetched query lengths
    t_end = ql_smem[b0]
    for g in range(1, G):
        t_end = jnp.maximum(t_end, ql_smem[b0 + g])
    t_end = jnp.minimum(t_end, Tqp)
    n_steps = jnp.maximum(t_end - 1, 0)

    UNROLL = 8

    def chunk(c, carry):
        a_blk, a_lab = carry
        base = 1 + c * UNROLL
        for i in range(UNROLL):                  # static unroll -> LLO overlap
            t = base + i
            tr = jnp.minimum(t, Tqp - 1)         # stay inside the block
            e = attn_ref[tr] - norm_ref[tr]      # (G, Kpad) normalized logp
            new_blk = lse2(a_blk, a_lab) + e[:, 0:1]
            new_lab = lse3(a_lab, shift1(a_blk), shift1(a_lab)) + e
            upd = t < ql_vec                     # per-batch freeze past ql
            a_blk = jnp.where(upd, new_blk, a_blk)
            a_lab = jnp.where(upd, new_lab, a_lab)
        return a_blk, a_lab

    a_blk, a_lab = lax.fori_loop(0, pl.cdiv(n_steps, UNROLL), chunk,
                                 (a_blk0, a_lab0))

    # final = logsumexp(alpha[last blank], alpha[last label]) at lane S_b
    sel = lane == kl_vec
    sel_blk = jnp.max(jnp.where(sel, a_blk, NEG), axis=-1, keepdims=True)
    sel_lab = jnp.max(jnp.where(sel, a_lab, NEG), axis=-1, keepdims=True)
    loss = -lse2(sel_blk, sel_lab)               # (G, 1)

    # zero_infinity=True: impossible alignments contribute 0; guard kl/ql == 0
    # (also covers the padded dummy batches).
    loss = jnp.where(loss < 1e29, loss, 0.0)
    valid = (kl_vec > 0) & (ql_vec > 0)
    loss = jnp.where(valid,
                     loss / jnp.maximum(kl_vec, 1).astype(jnp.float32), 0.0)
    out_ref[...] = jnp.broadcast_to(loss, out_ref.shape)


def forward_sum_loss(attn_logprob, key_lens, query_lens, blank_logprob=-1.0):
    """attn_logprob: (B, 1, Tq, K) float; key_lens/query_lens: (B,) int."""
    B, one, Tq, K = attn_logprob.shape
    assert one == 1
    G = GROUP
    NG = (B + G - 1) // G
    Bpad = NG * G
    Kp1 = K + 1
    Kpad = max(128, ((Kp1 + 127) // 128) * 128)     # lane-dense class axis
    Tqp = ((Tq + 7) // 8) * 8                       # sublane-aligned time axis

    x = attn_logprob[:, 0, :, :].astype(jnp.float32)              # (B, Tq, K)
    x = jnp.pad(x, ((0, Bpad - B), (0, Tqp - Tq), (0, 0)),
                constant_values=MASK_VAL)
    x = jnp.pad(x, ((0, 0), (0, 0), (1, 0)), constant_values=blank_logprob)
    x = jnp.pad(x, ((0, 0), (0, 0), (0, Kpad - Kp1)),
                constant_values=MASK_VAL)
    # group batches into sublanes, time-major per group: (NG, Tqp, G, Kpad)
    x = x.reshape(NG, G, Tqp, Kpad).transpose(0, 2, 1, 3)

    kl_p = jnp.pad(key_lens.astype(jnp.int32), (0, Bpad - B))
    ql_p = jnp.pad(query_lens.astype(jnp.int32), (0, Bpad - B))
    kl2 = kl_p.reshape(Bpad, 1)
    ql2 = ql_p.reshape(Bpad, 1)

    slab = Tqp * G * Kpad * 4
    norm_b = Tqp * G * 128 * 4
    vmem_bytes = int(min(100 * 1024 * 1024,
                         max(32 * 1024 * 1024, 2 * slab + norm_b + (4 << 20))))

    grid_spec = pltpu.PrefetchScalarGridSpec(
        num_scalar_prefetch=1,
        grid=(NG,),
        in_specs=[
            pl.BlockSpec((None, Tqp, G, Kpad), lambda g, ql: (g, 0, 0, 0)),
            pl.BlockSpec((G, 1), lambda g, ql: (g, 0)),
            pl.BlockSpec((G, 1), lambda g, ql: (g, 0)),
        ],
        out_specs=pl.BlockSpec((None, G, 128), lambda g, ql: (g, 0, 0)),
        scratch_shapes=[pltpu.VMEM((Tqp, G, 1), jnp.float32)],
    )

    out = pl.pallas_call(
        _forward_sum_kernel,
        grid_spec=grid_spec,
        out_shape=jax.ShapeDtypeStruct((NG, G, 128), jnp.float32),
        compiler_params=pltpu.CompilerParams(
            dimension_semantics=("parallel",),
            vmem_limit_bytes=vmem_bytes),
    )(ql_p, x, kl2, ql2)

    # reduction='mean': per-batch losses already divided by target lengths;
    # padded dummy batches contribute exactly 0.
    per_batch = out[:, :, 0].reshape(Bpad)
    return jnp.sum(per_batch) / B


def _forward_sum_loss_ref(attn_logprob, key_lens, query_lens, blank_logprob=-1.0):
    """Pure NumPy reference (standard CTC alpha recursion), float64."""
    attn = np.asarray(attn_logprob, dtype=np.float64)
    key_lens = np.asarray(key_lens)
    query_lens = np.asarray(query_lens)
    B, _, Tq, K = attn.shape
    x = attn[:, 0]
    x = np.concatenate([np.full((B, Tq, 1), float(blank_logprob)), x], axis=-1)
    kidx = np.arange(K + 1)[None, None, :]
    x = np.where(kidx > key_lens[:, None, None], -1e15, x)
    m = x.max(axis=-1, keepdims=True)
    x = x - (m + np.log(np.exp(x - m).sum(axis=-1, keepdims=True)))

    def lse(vals):
        v = np.asarray(vals, dtype=np.float64)
        mm = v.max()
        return mm + np.log(np.exp(v - mm).sum())

    losses = []
    for b in range(B):
        T, S = int(query_lens[b]), int(key_lens[b])
        ext = [0]
        for j in range(1, S + 1):
            ext += [j, 0]
        L = len(ext)
        alpha = np.full(L, -1e30)
        alpha[0] = x[b, 0, ext[0]]
        if L > 1:
            alpha[1] = x[b, 0, ext[1]]
        for t in range(1, T):
            new = np.full(L, -1e30)
            for s in range(L):
                cands = [alpha[s]]
                if s - 1 >= 0:
                    cands.append(alpha[s - 1])
                if s - 2 >= 0 and ext[s] != 0 and ext[s] != ext[s - 2]:
                    cands.append(alpha[s - 2])
                new[s] = lse(cands) + x[b, t, ext[s]]
            alpha = new
        nll = -(lse([alpha[-1], alpha[-2]]) if L > 1 else alpha[-1])
        if (not np.isfinite(nll)) or nll > 1e29:
            nll = 0.0
        losses.append(nll / max(S, 1))
    return float(np.mean(losses))


if __name__ == "__main__":
    key = jax.random.PRNGKey(0)
    # batch, max query len (frames), max key len (tokens) — B=10 exercises two
    # batch groups; lens include full-length, impossible (zero_infinity) cases.
    B, Tq, K = 10, 20, 12
    attn_logprob = jax.random.normal(key, (B, 1, Tq, K), dtype=jnp.float32)
    key_lens = jnp.array([8, 5, 12, 3, 10, 1, 7, 12, 4, 9], dtype=jnp.int32)
    query_lens = jnp.array([20, 12, 7, 20, 15, 16, 9, 18, 1, 14], dtype=jnp.int32)

    loss = forward_sum_loss(attn_logprob, key_lens, query_lens, blank_logprob=-1.0)
    loss = jax.block_until_ready(loss)

    ref = _forward_sum_loss_ref(np.asarray(attn_logprob), np.asarray(key_lens),
                                np.asarray(query_lens), blank_logprob=-1.0)
    np.testing.assert_allclose(float(loss), ref, rtol=2e-3, atol=2e-3)
    print("KERNEL_OK")
</pallas_src>

<mosaic_0001>
module attributes {stable_mosaic.version = 11 : i64} {
  func.func @_forward_sum_kernel(%arg0: i32, %arg1: memref<16xi32, #tpu.memory_space<smem>>, %arg2: memref<1x24x8x128xf32, #tpu.memory_space<vmem>>, %arg3: memref<8x1xi32, #tpu.memory_space<vmem>>, %arg4: memref<8x1xi32, #tpu.memory_space<vmem>>, %arg5: memref<1x8x128xf32, #tpu.memory_space<vmem>>, %arg6: memref<24x8x1xf32, #tpu.memory_space<vmem>>) attributes {dimension_semantics = [#tpu.dimension_semantics<parallel>], iteration_bounds = array<i64: 2>, scalar_prefetch = 1 : i64, scratch_operands = 1 : i64, tpu.core_type = #tpu.core_type<tc>, window_params = [{transform_indices = @transform_0, window_bounds = array<i64: 1, 24, 8, 128>}, {transform_indices = @transform_1, window_bounds = array<i64: 8, 1>}, {transform_indices = @transform_2, window_bounds = array<i64: 8, 1>}, {transform_indices = @transform_3, window_bounds = array<i64: 1, 8, 128>}]} {
    %c8_i32 = arith.constant 8 : i32
    %0 = arith.muli %arg0, %c8_i32 : i32
    %c0 = arith.constant 0 : index
    %c0_0 = arith.constant 0 : index
    %1 = vector.load %arg3[%c0, %c0_0] : memref<8x1xi32, #tpu.memory_space<vmem>>, vector<8x1xi32>
    %c0_1 = arith.constant 0 : index
    %c0_2 = arith.constant 0 : index
    %2 = vector.load %arg4[%c0_1, %c0_2] : memref<8x1xi32, #tpu.memory_space<vmem>>, vector<8x1xi32>
    %3 = tpu.iota {dimensions = array<i32: 2>} : vector<8x8x128xi32>
    %c0_i32 = arith.constant 0 : i32
    %c3_i32 = arith.constant 3 : i32
    %4 = arith.addi %c0_i32, %c3_i32 : i32
    %c1_i32 = arith.constant 1 : i32
    scf.for %arg7 = %c0_i32 to %4 step %c1_i32  : i32 {
      %c8_i32_38 = arith.constant 8 : i32
      %105 = arith.muli %arg7, %c8_i32_38 : i32
      %106 = tpu.assume_multiple %105, 8 : i32
      %c0_39 = arith.constant 0 : index
      %107 = arith.index_cast %106 : i32 to index
      %c0_40 = arith.constant 0 : index
      %c0_41 = arith.constant 0 : index
      %108 = vector.load %arg2[%c0_39, %107, %c0_40, %c0_41] : memref<1x24x8x128xf32, #tpu.memory_space<vmem>>, vector<1x8x8x128xf32>
      %109 = vector.shape_cast %108 : vector<1x8x8x128xf32> to vector<8x8x128xf32>
      %110 = vector.shape_cast %1 : vector<8x1xi32> to vector<1x8x1xi32>
      %111 = vector.broadcast %110 : vector<1x8x1xi32> to vector<8x8x128xi32>
      %112 = arith.cmpi sgt, %3, %111 : vector<8x8x128xi32>
      %cst_42 = arith.constant -9.99999986E+14 : f32
      %113 = vector.broadcast %cst_42 : f32 to vector<8x8x128xf32>
      %114 = arith.select %112, %113, %109 : vector<8x8x128xi1>, vector<8x8x128xf32>
      %cst_43 = arith.constant dense<0xFF800000> : vector<8x8xf32>
      %115 = vector.multi_reduction <maximumf>, %114, %cst_43 [2] : vector<8x8x128xf32> to vector<8x8xf32>
      %116 = vector.shape_cast %115 : vector<8x8xf32> to vector<8x8x1xf32>
      %117 = vector.broadcast %116 : vector<8x8x1xf32> to vector<8x8x128xf32>
      %118 = arith.subf %114, %117 : vector<8x8x128xf32>
      %119 = math.exp %118 : vector<8x8x128xf32>
      %cst_44 = arith.constant dense<0.000000e+00> : vector<8x8xf32>
      %120 = vector.multi_reduction <add>, %119, %cst_44 [2] : vector<8x8x128xf32> to vector<8x8xf32>
      %121 = vector.shape_cast %120 : vector<8x8xf32> to vector<8x8x1xf32>
      %122 = math.log %121 : vector<8x8x1xf32>
      %123 = arith.addf %116, %122 : vector<8x8x1xf32>
      %124 = arith.index_cast %106 : i32 to index
      %c0_45 = arith.constant 0 : index
      %c0_46 = arith.constant 0 : index
      %125 = vector.load %arg6[%124, %c0_45, %c0_46] : memref<24x8x1xf32, #tpu.memory_space<vmem>>, vector<8x8x1xf32>
      tpu.vector_store %arg6[%124, %c0_45, %c0_46], %123 {strides = array<i32>} : memref<24x8x1xf32, #tpu.memory_space<vmem>>, vector<8x8x1xf32>,
    }
    %c3_i32_3 = arith.constant 3 : i32
    %5 = tpu.iota {dimensions = array<i32: 1>} : vector<1x128xi32>
    %c0_4 = arith.constant 0 : index
    %c0_5 = arith.constant 0 : index
    %c0_6 = arith.constant 0 : index
    %c0_7 = arith.constant 0 : index
    %6 = vector.load %arg2[%c0_4, %c0_5, %c0_6, %c0_7] : memref<1x24x8x128xf32, #tpu.memory_space<vmem>>, vector<1x1x8x128xf32>
    %7 = vector.shape_cast %6 : vector<1x1x8x128xf32> to vector<8x128xf32>
    %c0_8 = arith.constant 0 : index
    %c0_9 = arith.constant 0 : index
    %c0_10 = arith.constant 0 : index
    %8 = vector.load %arg6[%c0_8, %c0_9, %c0_10] : memref<24x8x1xf32, #tpu.memory_space<vmem>>, vector<1x8x1xf32>
    %9 = vector.shape_cast %8 : vector<1x8x1xf32> to vector<8x1xf32>
    %10 = vector.broadcast %9 : vector<8x1xf32> to vector<8x128xf32>
    %11 = arith.subf %7, %10 : vector<8x128xf32>
    %c0_i32_11 = arith.constant 0 : i32
    %12 = vector.broadcast %c0_i32_11 : i32 to vector<1x128xi32>
    %13 = arith.cmpi eq, %5, %12 : vector<1x128xi32>
    %cst = arith.constant -1.000000e+30 : f32
    %14 = vector.shape_cast %13 : vector<1x128xi1> to vector<1x128xi1>
    %15 = vector.broadcast %14 : vector<1x128xi1> to vector<8x128xi1>
    %16 = vector.broadcast %cst : f32 to vector<8x128xf32>
    %17 = arith.select %15, %11, %16 : vector<8x128xi1>, vector<8x128xf32>
    %c1_i32_12 = arith.constant 1 : i32
    %18 = vector.broadcast %c1_i32_12 : i32 to vector<1x128xi32>
    %19 = arith.cmpi eq, %5, %18 : vector<1x128xi32>
    %cst_13 = arith.constant -1.000000e+30 : f32
    %20 = vector.shape_cast %19 : vector<1x128xi1> to vector<1x128xi1>
    %21 = vector.broadcast %20 : vector<1x128xi1> to vector<8x128xi1>
    %22 = vector.broadcast %cst_13 : f32 to vector<8x128xf32>
    %23 = arith.select %21, %11, %22 : vector<8x128xi1>, vector<8x128xf32>
    %24 = arith.index_cast %0 : i32 to index
    %25 = memref.load %arg1[%24] : memref<16xi32, #tpu.memory_space<smem>>
    %c1_i32_14 = arith.constant 1 : i32
    %26 = arith.addi %0, %c1_i32_14 : i32
    %27 = arith.index_cast %26 : i32 to index
    %28 = memref.load %arg1[%27] : memref<16xi32, #tpu.memory_space<smem>>
    %29 = arith.maxsi %25, %28 : i32
    %c2_i32 = arith.constant 2 : i32
    %30 = arith.addi %0, %c2_i32 : i32
    %31 = arith.index_cast %30 : i32 to index
    %32 = memref.load %arg1[%31] : memref<16xi32, #tpu.memory_space<smem>>
    %33 = arith.maxsi %29, %32 : i32
    %c3_i32_15 = arith.constant 3 : i32
    %34 = arith.addi %0, %c3_i32_15 : i32
    %35 = arith.index_cast %34 : i32 to index
    %36 = memref.load %arg1[%35] : memref<16xi32, #tpu.memory_space<smem>>
    %37 = arith.maxsi %33, %36 : i32
    %c4_i32 = arith.constant 4 : i32
    %38 = arith.addi %0, %c4_i32 : i32
    %39 = arith.index_cast %38 : i32 to index
    %40 = memref.load %arg1[%39] : memref<16xi32, #tpu.memory_space<smem>>
    %41 = arith.maxsi %37, %40 : i32
    %c5_i32 = arith.constant 5 : i32
    %42 = arith.addi %0, %c5_i32 : i32
    %43 = arith.index_cast %42 : i32 to index
    %44 = memref.load %arg1[%43] : memref<16xi32, #tpu.memory_space<smem>>
    %45 = arith.maxsi %41, %44 : i32
    %c6_i32 = arith.constant 6 : i32
    %46 = arith.addi %0, %c6_i32 : i32
    %47 = arith.index_cast %46 : i32 to index
    %48 = memref.load %arg1[%47] : memref<16xi32, #tpu.memory_space<smem>>
    %49 = arith.maxsi %45, %48 : i32
    %c7_i32 = arith.constant 7 : i32
    %50 = arith.addi %0, %c7_i32 : i32
    %51 = arith.index_cast %50 : i32 to index
    %52 = memref.load %arg1[%51] : memref<16xi32, #tpu.memory_space<smem>>
    %53 = arith.maxsi %49, %52 : i32
    %c24_i32 = arith.constant 24 : i32
    %54 = arith.minsi %53, %c24_i32 : i32
    %c1_i32_16 = arith.constant 1 : i32
    %55 = arith.subi %54, %c1_i32_16 : i32
    %c0_i32_17 = arith.constant 0 : i32
    %56 = arith.maxsi %55, %c0_i32_17 : i32
    %c7_i32_18 = arith.constant 7 : i32
    %57 = arith.addi %56, %c7_i32_18 : i32
    %c8_i32_19 = arith.constant 8 : i32
    %58 = arith.divsi %57, %c8_i32_19 : i32
    %c0_i32_20 = arith.constant 0 : i32
    %59 = arith.subi %58, %c0_i32_20 : i32
    %60 = arith.addi %c0_i32_20, %59 : i32
    %c1_i32_21 = arith.constant 1 : i32
    %61:2 = scf.for %arg7 = %c0_i32_20 to %60 step %c1_i32_21 iter_args(%arg8 = %17, %arg9 = %23) -> (vector<8x128xf32>, vector<8x128xf32>)  : i32 {
      %c8_i32_38 = arith.constant 8 : i32
      %105 = arith.muli %arg7, %c8_i32_38 : i32
      %c1_i32_39 = arith.constant 1 : i32
      %106 = arith.addi %c1_i32_39, %105 : i32
      %c0_i32_40 = arith.constant 0 : i32
      %107 = arith.addi %106, %c0_i32_40 : i32
      %c23_i32 = arith.constant 23 : i32
      %108 = arith.minsi %107, %c23_i32 : i32
      %c0_41 = arith.constant 0 : index
      %109 = arith.index_cast %108 : i32 to index
      %c0_42 = arith.constant 0 : index
      %c0_43 = arith.constant 0 : index
      %110 = vector.load %arg2[%c0_41, %109, %c0_42, %c0_43] : memref<1x24x8x128xf32, #tpu.memory_space<vmem>>, vector<1x1x8x128xf32>
      %111 = vector.shape_cast %110 : vector<1x1x8x128xf32> to vector<8x128xf32>
      %112 = arith.index_cast %108 : i32 to index
      %c0_44 = arith.constant 0 : index
      %c0_45 = arith.constant 0 : index
      %113 = vector.load %arg6[%112, %c0_44, %c0_45] : memref<24x8x1xf32, #tpu.memory_space<vmem>>, vector<1x8x1xf32>
      %114 = vector.shape_cast %113 : vector<1x8x1xf32> to vector<8x1xf32>
      %115 = vector.broadcast %114 : vector<8x1xf32> to vector<8x128xf32>
      %116 = arith.subf %111, %115 : vector<8x128xf32>
      %117 = arith.maximumf %arg8, %arg9 : vector<8x128xf32>
      %118 = arith.subf %arg8, %arg9 : vector<8x128xf32>
      %119 = math.absf %118 : vector<8x128xf32>
      %cst_46 = arith.constant 0.000000e+00 : f32
      %120 = vector.broadcast %cst_46 : f32 to vector<8x128xf32>
      %121 = arith.subf %120, %119 : vector<8x128xf32>
      %122 = math.exp %121 : vector<8x128xf32>
      %cst_47 = arith.constant 1.000000e+00 : f32
      %123 = vector.broadcast %cst_47 : f32 to vector<8x128xf32>
      %124 = arith.addf %123, %122 : vector<8x128xf32>
      %125 = math.log %124 : vector<8x128xf32>
      %126 = arith.addf %117, %125 : vector<8x128xf32>
      %127 = vector.extract_strided_slice %116 {offsets = [0, 0], sizes = [8, 1], strides = [1, 1]} : vector<8x128xf32> to vector<8x1xf32>
      %128 = vector.broadcast %127 : vector<8x1xf32> to vector<8x128xf32>
      %129 = arith.addf %126, %128 : vector<8x128xf32>
      %c0_i32_48 = arith.constant 0 : i32
      %130 = vector.broadcast %c0_i32_48 : i32 to vector<1x128xi32>
      %131 = arith.cmpi eq, %5, %130 : vector<1x128xi32>
      %c1_i32_49 = arith.constant 1 : i32
      %132 = tpu.dynamic_rotate %arg8 by %c1_i32_49 dim 1 : vector<8x128xf32>, i32 -> vector<8x128xf32>
      %cst_50 = arith.constant -1.000000e+30 : f32
      %133 = vector.shape_cast %131 : vector<1x128xi1> to vector<1x128xi1>
      %134 = vector.broadcast %133 : vector<1x128xi1> to vector<8x128xi1>
      %135 = vector.broadcast %cst_50 : f32 to vector<8x128xf32>
      %136 = arith.select %134, %135, %132 : vector<8x128xi1>, vector<8x128xf32>
      %c0_i32_51 = arith.constant 0 : i32
      %137 = vector.broadcast %c0_i32_51 : i32 to vector<1x128xi32>
      %138 = arith.cmpi eq, %5, %137 : vector<1x128xi32>
      %c1_i32_52 = arith.constant 1 : i32
      %139 = tpu.dynamic_rotate %arg9 by %c1_i32_52 dim 1 : vector<8x128xf32>, i32 -> vector<8x128xf32>
      %cst_53 = arith.constant -1.000000e+30 : f32
      %140 = vector.shape_cast %138 : vector<1x128xi1> to vector<1x128xi1>
      %141 = vector.broadcast %140 : vector<1x128xi1> to vector<8x128xi1>
      %142 = vector.broadcast %cst_53 : f32 to vector<8x128xf32>
      %143 = arith.select %141, %142, %139 : vector<8x128xi1>, vector<8x128xf32>
      %144 = arith.maximumf %arg9, %136 : vector<8x128xf32>
      %145 = arith.maximumf %144, %143 : vector<8x128xf32>
      %146 = arith.subf %arg9, %145 : vector<8x128xf32>
      %147 = math.exp %146 : vector<8x128xf32>
      %148 = arith.subf %136, %145 : vector<8x128xf32>
      %149 = math.exp %148 : vector<8x128xf32>
      %150 = arith.addf %147, %149 : vector<8x128xf32>
      %151 = arith.subf %143, %145 : vector<8x128xf32>
      %152 = math.exp %151 : vector<8x128xf32>
      %153 = arith.addf %150, %152 : vector<8x128xf32>
      %154 = math.log %153 : vector<8x128xf32>
      %155 = arith.addf %145, %154 : vector<8x128xf32>
      %156 = arith.addf %155, %116 : vector<8x128xf32>
      %157 = vector.broadcast %107 : i32 to vector<8x1xi32>
      %158 = arith.cmpi slt, %157, %2 : vector<8x1xi32>
      %159 = vector.shape_cast %158 : vector<8x1xi1> to vector<8x1xi1>
      %160 = vector.broadcast %159 : vector<8x1xi1> to vector<8x128xi1>
      %161 = arith.select %160, %129, %arg8 : vector<8x128xi1>, vector<8x128xf32>
      %162 = vector.shape_cast %158 : vector<8x1xi1> to vector<8x1xi1>
      %163 = vector.broadcast %162 : vector<8x1xi1> to vector<8x128xi1>
      %164 = arith.select %163, %156, %arg9 : vector<8x128xi1>, vector<8x128xf32>
      %c1_i32_54 = arith.constant 1 : i32
      %165 = arith.addi %106, %c1_i32_54 : i32
      %c23_i32_55 = arith.constant 23 : i32
      %166 = arith.minsi %165, %c23_i32_55 : i32
      %c0_56 = arith.constant 0 : index
      %167 = arith.index_cast %166 : i32 to index
      %c0_57 = arith.constant 0 : index
      %c0_58 = arith.constant 0 : index
      %168 = vector.load %arg2[%c0_56, %167, %c0_57, %c0_58] : memref<1x24x8x128xf32, #tpu.memory_space<vmem>>, vector<1x1x8x128xf32>
      %169 = vector.shape_cast %168 : vector<1x1x8x128xf32> to vector<8x128xf32>
      %170 = arith.index_cast %166 : i32 to index
      %c0_59 = arith.constant 0 : index
      %c0_60 = arith.constant 0 : index
      %171 = vector.load %arg6[%170, %c0_59, %c0_60] : memref<24x8x1xf32, #tpu.memory_space<vmem>>, vector<1x8x1xf32>
      %172 = vector.shape_cast %171 : vector<1x8x1xf32> to vector<8x1xf32>
      %173 = vector.broadcast %172 : vector<8x1xf32> to vector<8x128xf32>
      %174 = arith.subf %169, %173 : vector<8x128xf32>
      %175 = arith.maximumf %161, %164 : vector<8x128xf32>
      %176 = arith.subf %161, %164 : vector<8x128xf32>
      %177 = math.absf %176 : vector<8x128xf32>
      %cst_61 = arith.constant 0.000000e+00 : f32
      %178 = vector.broadcast %cst_61 : f32 to vector<8x128xf32>
      %179 = arith.subf %178, %177 : vector<8x128xf32>
      %180 = math.exp %179 : vector<8x128xf32>
      %cst_62 = arith.constant 1.000000e+00 : f32
      %181 = vector.broadcast %cst_62 : f32 to vector<8x128xf32>
      %182 = arith.addf %181, %180 : vector<8x128xf32>
      %183 = math.log %182 : vector<8x128xf32>
      %184 = arith.addf %175, %183 : vector<8x128xf32>
      %185 = vector.extract_strided_slice %174 {offsets = [0, 0], sizes = [8, 1], strides = [1, 1]} : vector<8x128xf32> to vector<8x1xf32>
      %186 = vector.broadcast %185 : vector<8x1xf32> to vector<8x128xf32>
      %187 = arith.addf %184, %186 : vector<8x128xf32>
      %c0_i32_63 = arith.constant 0 : i32
      %188 = vector.broadcast %c0_i32_63 : i32 to vector<1x128xi32>
      %189 = arith.cmpi eq, %5, %188 : vector<1x128xi32>
      %c1_i32_64 = arith.constant 1 : i32
      %190 = tpu.dynamic_rotate %161 by %c1_i32_64 dim 1 : vector<8x128xf32>, i32 -> vector<8x128xf32>
      %cst_65 = arith.constant -1.000000e+30 : f32
      %191 = vector.shape_cast %189 : vector<1x128xi1> to vector<1x128xi1>
      %192 = vector.broadcast %191 : vector<1x128xi1> to vector<8x128xi1>
      %193 = vector.broadcast %cst_65 : f32 to vector<8x128xf32>
      %194 = arith.select %192, %193, %190 : vector<8x128xi1>, vector<8x128xf32>
      %c0_i32_66 = arith.constant 0 : i32
      %195 = vector.broadcast %c0_i32_66 : i32 to vector<1x128xi32>
      %196 = arith.cmpi eq, %5, %195 : vector<1x128xi32>
      %c1_i32_67 = arith.constant 1 : i32
      %197 = tpu.dynamic_rotate %164 by %c1_i32_67 dim 1 : vector<8x128xf32>, i32 -> vector<8x128xf32>
      %cst_68 = arith.constant -1.000000e+30 : f32
      %198 = vector.shape_cast %196 : vector<1x128xi1> to vector<1x128xi1>
      %199 = vector.broadcast %198 : vector<1x128xi1> to vector<8x128xi1>
      %200 = vector.broadcast %cst_68 : f32 to vector<8x128xf32>
      %201 = arith.select %199, %200, %197 : vector<8x128xi1>, vector<8x128xf32>
      %202 = arith.maximumf %164, %194 : vector<8x128xf32>
      %203 = arith.maximumf %202, %201 : vector<8x128xf32>
      %204 = arith.subf %164, %203 : vector<8x128xf32>
      %205 = math.exp %204 : vector<8x128xf32>
      %206 = arith.subf %194, %203 : vector<8x128xf32>
      %207 = math.exp %206 : vector<8x128xf32>
      %208 = arith.addf %205, %207 : vector<8x128xf32>
      %209 = arith.subf %201, %203 : vector<8x128xf32>
      %210 = math.exp %209 : vector<8x128xf32>
      %211 = arith.addf %208, %210 : vector<8x128xf32>
      %212 = math.log %211 : vector<8x128xf32>
      %213 = arith.addf %203, %212 : vector<8x128xf32>
      %214 = arith.addf %213, %174 : vector<8x128xf32>
      %215 = vector.broadcast %165 : i32 to vector<8x1xi32>
      %216 = arith.cmpi slt, %215, %2 : vector<8x1xi32>
      %217 = vector.shape_cast %216 : vector<8x1xi1> to vector<8x1xi1>
      %218 = vector.broadcast %217 : vector<8x1xi1> to vector<8x128xi1>
      %219 = arith.select %218, %187, %161 : vector<8x128xi1>, vector<8x128xf32>
      %220 = vector.shape_cast %216 : vector<8x1xi1> to vector<8x1xi1>
      %221 = vector.broadcast %220 : vector<8x1xi1> to vector<8x128xi1>
      %222 = arith.select %221, %214, %164 : vector<8x128xi1>, vector<8x128xf32>
      %c2_i32_69 = arith.constant 2 : i32
      %223 = arith.addi %106, %c2_i32_69 : i32
      %c23_i32_70 = arith.constant 23 : i32
      %224 = arith.minsi %223, %c23_i32_70 : i32
      %c0_71 = arith.constant 0 : index
      %225 = arith.index_cast %224 : i32 to index
      %c0_72 = arith.constant 0 : index
      %c0_73 = arith.constant 0 : index
      %226 = vector.load %arg2[%c0_71, %225, %c0_72, %c0_73] : memref<1x24x8x128xf32, #tpu.memory_space<vmem>>, vector<1x1x8x128xf32>
      %227 = vector.shape_cast %226 : vector<1x1x8x128xf32> to vector<8x128xf32>
      %228 = arith.index_cast %224 : i32 to index
      %c0_74 = arith.constant 0 : index
      %c0_75 = arith.constant 0 : index
      %229 = vector.load %arg6[%228, %c0_74, %c0_75] : memref<24x8x1xf32, #tpu.memory_space<vmem>>, vector<1x8x1xf32>
      %230 = vector.shape_cast %229 : vector<1x8x1xf32> to vector<8x1xf32>
      %231 = vector.broadcast %230 : vector<8x1xf32> to vector<8x128xf32>
      %232 = arith.subf %227, %231 : vector<8x128xf32>
      %233 = arith.maximumf %219, %222 : vector<8x128xf32>
      %234 = arith.subf %219, %222 : vector<8x128xf32>
      %235 = math.absf %234 : vector<8x128xf32>
      %cst_76 = arith.constant 0.000000e+00 : f32
      %236 = vector.broadcast %cst_76 : f32 to vector<8x128xf32>
      %237 = arith.subf %236, %235 : vector<8x128xf32>
      %238 = math.exp %237 : vector<8x128xf32>
      %cst_77 = arith.constant 1.000000e+00 : f32
      %239 = vector.broadcast %cst_77 : f32 to vector<8x128xf32>
      %240 = arith.addf %239, %238 : vector<8x128xf32>
      %241 = math.log %240 : vector<8x128xf32>
      %242 = arith.addf %233, %241 : vector<8x128xf32>
      %243 = vector.extract_strided_slice %232 {offsets = [0, 0], sizes = [8, 1], strides = [1, 1]} : vector<8x128xf32> to vector<8x1xf32>
      %244 = vector.broadcast %243 : vector<8x1xf32> to vector<8x128xf32>
      %245 = arith.addf %242, %244 : vector<8x128xf32>
      %c0_i32_78 = arith.constant 0 : i32
      %246 = vector.broadcast %c0_i32_78 : i32 to vector<1x128xi32>
      %247 = arith.cmpi eq, %5, %246 : vector<1x128xi32>
      %c1_i32_79 = arith.constant 1 : i32
      %248 = tpu.dynamic_rotate %219 by %c1_i32_79 dim 1 : vector<8x128xf32>, i32 -> vector<8x128xf32>
      %cst_80 = arith.constant -1.000000e+30 : f32
      %249 = vector.shape_cast %247 : vector<1x128xi1> to vector<1x128xi1>
      %250 = vector.broadcast %249 : vector<1x128xi1> to vector<8x128xi1>
      %251 = vector.broadcast %cst_80 : f32 to vector<8x128xf32>
      %252 = arith.select %250, %251, %248 : vector<8x128xi1>, vector<8x128xf32>
      %c0_i32_81 = arith.constant 0 : i32
      %253 = vector.broadcast %c0_i32_81 : i32 to vector<1x128xi32>
      %254 = arith.cmpi eq, %5, %253 : vector<1x128xi32>
      %c1_i32_82 = arith.constant 1 : i32
      %255 = tpu.dynamic_rotate %222 by %c1_i32_82 dim 1 : vector<8x128xf32>, i32 -> vector<8x128xf32>
      %cst_83 = arith.constant -1.000000e+30 : f32
      %256 = vector.shape_cast %254 : vector<1x128xi1> to vector<1x128xi1>
      %257 = vector.broadcast %256 : vector<1x128xi1> to vector<8x128xi1>
      %258 = vector.broadcast %cst_83 : f32 to vector<8x128xf32>
      %259 = arith.select %257, %258, %255 : vector<8x128xi1>, vector<8x128xf32>
      %260 = arith.maximumf %222, %252 : vector<8x128xf32>
      %261 = arith.maximumf %260, %259 : vector<8x128xf32>
      %262 = arith.subf %222, %261 : vector<8x128xf32>
      %263 = math.exp %262 : vector<8x128xf32>
      %264 = arith.subf %252, %261 : vector<8x128xf32>
      %265 = math.exp %264 : vector<8x128xf32>
      %266 = arith.addf %263, %265 : vector<8x128xf32>
      %267 = arith.subf %259, %261 : vector<8x128xf32>
      %268 = math.exp %267 : vector<8x128xf32>
      %269 = arith.addf %266, %268 : vector<8x128xf32>
      %270 = math.log %269 : vector<8x128xf32>
      %271 = arith.addf %261, %270 : vector<8x128xf32>
      %272 = arith.addf %271, %232 : vector<8x128xf32>
      %273 = vector.broadcast %223 : i32 to vector<8x1xi32>
      %274 = arith.cmpi slt, %273, %2 : vector<8x1xi32>
      %275 = vector.shape_cast %274 : vector<8x1xi1> to vector<8x1xi1>
      %276 = vector.broadcast %275 : vector<8x1xi1> to vector<8x128xi1>
      %277 = arith.select %276, %245, %219 : vector<8x128xi1>, vector<8x128xf32>
      %278 = vector.shape_cast %274 : vector<8x1xi1> to vector<8x1xi1>
      %279 = vector.broadcast %278 : vector<8x1xi1> to vector<8x128xi1>
      %280 = arith.select %279, %272, %222 : vector<8x128xi1>, vector<8x128xf32>
      %c3_i32_84 = arith.constant 3 : i32
      %281 = arith.addi %106, %c3_i32_84 : i32
      %c23_i32_85 = arith.constant 23 : i32
      %282 = arith.minsi %281, %c23_i32_85 : i32
      %c0_86 = arith.constant 0 : index
      %283 = arith.index_cast %282 : i32 to index
      %c0_87 = arith.constant 0 : index
      %c0_88 = arith.constant 0 : index
      %284 = vector.load %arg2[%c0_86, %283, %c0_87, %c0_88] : memref<1x24x8x128xf32, #tpu.memory_space<vmem>>, vector<1x1x8x128xf32>
      %285 = vector.shape_cast %284 : vector<1x1x8x128xf32> to vector<8x128xf32>
      %286 = arith.index_cast %282 : i32 to index
      %c0_89 = arith.constant 0 : index
      %c0_90 = arith.constant 0 : index
      %287 = vector.load %arg6[%286, %c0_89, %c0_90] : memref<24x8x1xf32, #tpu.memory_space<vmem>>, vector<1x8x1xf32>
      %288 = vector.shape_cast %287 : vector<1x8x1xf32> to vector<8x1xf32>
      %289 = vector.broadcast %288 : vector<8x1xf32> to vector<8x128xf32>
      %290 = arith.subf %285, %289 : vector<8x128xf32>
      %291 = arith.maximumf %277, %280 : vector<8x128xf32>
      %292 = arith.subf %277, %280 : vector<8x128xf32>
      %293 = math.absf %292 : vector<8x128xf32>
      %cst_91 = arith.constant 0.000000e+00 : f32
      %294 = vector.broadcast %cst_91 : f32 to vector<8x128xf32>
      %295 = arith.subf %294, %293 : vector<8x128xf32>
      %296 = math.exp %295 : vector<8x128xf32>
      %cst_92 = arith.constant 1.000000e+00 : f32
      %297 = vector.broadcast %cst_92 : f32 to vector<8x128xf32>
      %298 = arith.addf %297, %296 : vector<8x128xf32>
      %299 = math.log %298 : vector<8x128xf32>
      %300 = arith.addf %291, %299 : vector<8x128xf32>
      %301 = vector.extract_strided_slice %290 {offsets = [0, 0], sizes = [8, 1], strides = [1, 1]} : vector<8x128xf32> to vector<8x1xf32>
      %302 = vector.broadcast %301 : vector<8x1xf32> to vector<8x128xf32>
      %303 = arith.addf %300, %302 : vector<8x128xf32>
      %c0_i32_93 = arith.constant 0 : i32
      %304 = vector.broadcast %c0_i32_93 : i32 to vector<1x128xi32>
      %305 = arith.cmpi eq, %5, %304 : vector<1x128xi32>
      %c1_i32_94 = arith.constant 1 : i32
      %306 = tpu.dynamic_rotate %277 by %c1_i32_94 dim 1 : vector<8x128xf32>, i32 -> vector<8x128xf32>
      %cst_95 = arith.constant -1.000000e+30 : f32
      %307 = vector.shape_cast %305 : vector<1x128xi1> to vector<1x128xi1>
      %308 = vector.broadcast %307 : vector<1x128xi1> to vector<8x128xi1>
      %309 = vector.broadcast %cst_95 : f32 to vector<8x128xf32>
      %310 = arith.select %308, %309, %306 : vector<8x128xi1>, vector<8x128xf32>
      %c0_i32_96 = arith.constant 0 : i32
      %311 = vector.broadcast %c0_i32_96 : i32 to vector<1x128xi32>
      %312 = arith.cmpi eq, %5, %311 : vector<1x128xi32>
      %c1_i32_97 = arith.constant 1 : i32
      %313 = tpu.dynamic_rotate %280 by %c1_i32_97 dim 1 : vector<8x128xf32>, i32 -> vector<8x128xf32>
      %cst_98 = arith.constant -1.000000e+30 : f32
      %314 = vector.shape_cast %312 : vector<1x128xi1> to vector<1x128xi1>
      %315 = vector.broadcast %314 : vector<1x128xi1> to vector<8x128xi1>
      %316 = vector.broadcast %cst_98 : f32 to vector<8x128xf32>
      %317 = arith.select %315, %316, %313 : vector<8x128xi1>, vector<8x128xf32>
      %318 = arith.maximumf %280, %310 : vector<8x128xf32>
      %319 = arith.maximumf %318, %317 : vector<8x128xf32>
      %320 = arith.subf %280, %319 : vector<8x128xf32>
      %321 = math.exp %320 : vector<8x128xf32>
      %322 = arith.subf %310, %319 : vector<8x128xf32>
      %323 = math.exp %322 : vector<8x128xf32>
      %324 = arith.addf %321, %323 : vector<8x128xf32>
      %325 = arith.subf %317, %319 : vector<8x128xf32>
      %326 = math.exp %325 : vector<8x128xf32>
      %327 = arith.addf %324, %326 : vector<8x128xf32>
      %328 = math.log %327 : vector<8x128xf32>
      %329 = arith.addf %319, %328 : vector<8x128xf32>
      %330 = arith.addf %329, %290 : vector<8x128xf32>
      %331 = vector.broadcast %281 : i32 to vector<8x1xi32>
      %332 = arith.cmpi slt, %331, %2 : vector<8x1xi32>
      %333 = vector.shape_cast %332 : vector<8x1xi1> to vector<8x1xi1>
      %334 = vector.broadcast %333 : vector<8x1xi1> to vector<8x128xi1>
      %335 = arith.select %334, %303, %277 : vector<8x128xi1>, vector<8x128xf32>
      %336 = vector.shape_cast %332 : vector<8x1xi1> to vector<8x1xi1>
      %337 = vector.broadcast %336 : vector<8x1xi1> to vector<8x128xi1>
      %338 = arith.select %337, %330, %280 : vector<8x128xi1>, vector<8x128xf32>
      %c4_i32_99 = arith.constant 4 : i32
      %339 = arith.addi %106, %c4_i32_99 : i32
      %c23_i32_100 = arith.constant 23 : i32
      %340 = arith.minsi %339, %c23_i32_100 : i32
      %c0_101 = arith.constant 0 : index
      %341 = arith.index_cast %340 : i32 to index
      %c0_102 = arith.constant 0 : index
      %c0_103 = arith.constant 0 : index
      %342 = vector.load %arg2[%c0_101, %341, %c0_102, %c0_103] : memref<1x24x8x128xf32, #tpu.memory_space<vmem>>, vector<1x1x8x128xf32>
      %343 = vector.shape_cast %342 : vector<1x1x8x128xf32> to vector<8x128xf32>
      %344 = arith.index_cast %340 : i32 to index
      %c0_104 = arith.constant 0 : index
      %c0_105 = arith.constant 0 : index
      %345 = vector.load %arg6[%344, %c0_104, %c0_105] : memref<24x8x1xf32, #tpu.memory_space<vmem>>, vector<1x8x1xf32>
      %346 = vector.shape_cast %345 : vector<1x8x1xf32> to vector<8x1xf32>
      %347 = vector.broadcast %346 : vector<8x1xf32> to vector<8x128xf32>
      %348 = arith.subf %343, %347 : vector<8x128xf32>
      %349 = arith.maximumf %335, %338 : vector<8x128xf32>
      %350 = arith.subf %335, %338 : vector<8x128xf32>
      %351 = math.absf %350 : vector<8x128xf32>
      %cst_106 = arith.constant 0.000000e+00 : f32
      %352 = vector.broadcast %cst_106 : f32 to vector<8x128xf32>
      %353 = arith.subf %352, %351 : vector<8x128xf32>
      %354 = math.exp %353 : vector<8x128xf32>
      %cst_107 = arith.constant 1.000000e+00 : f32
      %355 = vector.broadcast %cst_107 : f32 to vector<8x128xf32>
      %356 = arith.addf %355, %354 : vector<8x128xf32>
      %357 = math.log %356 : vector<8x128xf32>
      %358 = arith.addf %349, %357 : vector<8x128xf32>
      %359 = vector.extract_strided_slice %348 {offsets = [0, 0], sizes = [8, 1], strides = [1, 1]} : vector<8x128xf32> to vector<8x1xf32>
      %360 = vector.broadcast %359 : vector<8x1xf32> to vector<8x128xf32>
      %361 = arith.addf %358, %360 : vector<8x128xf32>
      %c0_i32_108 = arith.constant 0 : i32
      %362 = vector.broadcast %c0_i32_108 : i32 to vector<1x128xi32>
      %363 = arith.cmpi eq, %5, %362 : vector<1x128xi32>
      %c1_i32_109 = arith.constant 1 : i32
      %364 = tpu.dynamic_rotate %335 by %c1_i32_109 dim 1 : vector<8x128xf32>, i32 -> vector<8x128xf32>
      %cst_110 = arith.constant -1.000000e+30 : f32
      %365 = vector.shape_cast %363 : vector<1x128xi1> to vector<1x128xi1>
      %366 = vector.broadcast %365 : vector<1x128xi1> to vector<8x128xi1>
      %367 = vector.broadcast %cst_110 : f32 to vector<8x128xf32>
      %368 = arith.select %366, %367, %364 : vector<8x128xi1>, vector<8x128xf32>
      %c0_i32_111 = arith.constant 0 : i32
      %369 = vector.broadcast %c0_i32_111 : i32 to vector<1x128xi32>
      %370 = arith.cmpi eq, %5, %369 : vector<1x128xi32>
      %c1_i32_112 = arith.constant 1 : i32
      %371 = tpu.dynamic_rotate %338 by %c1_i32_112 dim 1 : vector<8x128xf32>, i32 -> vector<8x128xf32>
      %cst_113 = arith.constant -1.000000e+30 : f32
      %372 = vector.shape_cast %370 : vector<1x128xi1> to vector<1x128xi1>
      %373 = vector.broadcast %372 : vector<1x128xi1> to vector<8x128xi1>
      %374 = vector.broadcast %cst_113 : f32 to vector<8x128xf32>
      %375 = arith.select %373, %374, %371 : vector<8x128xi1>, vector<8x128xf32>
      %376 = arith.maximumf %338, %368 : vector<8x128xf32>
      %377 = arith.maximumf %376, %375 : vector<8x128xf32>
      %378 = arith.subf %338, %377 : vector<8x128xf32>
      %379 = math.exp %378 : vector<8x128xf32>
      %380 = arith.subf %368, %377 : vector<8x128xf32>
      %381 = math.exp %380 : vector<8x128xf32>
      %382 = arith.addf %379, %381 : vector<8x128xf32>
      %383 = arith.subf %375, %377 : vector<8x128xf32>
      %384 = math.exp %383 : vector<8x128xf32>
      %385 = arith.addf %382, %384 : vector<8x128xf32>
      %386 = math.log %385 : vector<8x128xf32>
      %387 = arith.addf %377, %386 : vector<8x128xf32>
      %388 = arith.addf %387, %348 : vector<8x128xf32>
      %389 = vector.broadcast %339 : i32 to vector<8x1xi32>
      %390 = arith.cmpi slt, %389, %2 : vector<8x1xi32>
      %391 = vector.shape_cast %390 : vector<8x1xi1> to vector<8x1xi1>
      %392 = vector.broadcast %391 : vector<8x1xi1> to vector<8x128xi1>
      %393 = arith.select %392, %361, %335 : vector<8x128xi1>, vector<8x128xf32>
      %394 = vector.shape_cast %390 : vector<8x1xi1> to vector<8x1xi1>
      %395 = vector.broadcast %394 : vector<8x1xi1> to vector<8x128xi1>
      %396 = arith.select %395, %388, %338 : vector<8x128xi1>, vector<8x128xf32>
      %c5_i32_114 = arith.constant 5 : i32
      %397 = arith.addi %106, %c5_i32_114 : i32
      %c23_i32_115 = arith.constant 23 : i32
      %398 = arith.minsi %397, %c23_i32_115 : i32
      %c0_116 = arith.constant 0 : index
      %399 = arith.index_cast %398 : i32 to index
      %c0_117 = arith.constant 0 : index
      %c0_118 = arith.constant 0 : index
      %400 = vector.load %arg2[%c0_116, %399, %c0_117, %c0_118] : memref<1x24x8x128xf32, #tpu.memory_space<vmem>>, vector<1x1x8x128xf32>
      %401 = vector.shape_cast %400 : vector<1x1x8x128xf32> to vector<8x128xf32>
      %402 = arith.index_cast %398 : i32 to index
      %c0_119 = arith.constant 0 : index
      %c0_120 = arith.constant 0 : index
      %403 = vector.load %arg6[%402, %c0_119, %c0_120] : memref<24x8x1xf32, #tpu.memory_space<vmem>>, vector<1x8x1xf32>
      %404 = vector.shape_cast %403 : vector<1x8x1xf32> to vector<8x1xf32>
      %405 = vector.broadcast %404 : vector<8x1xf32> to vector<8x128xf32>
      %406 = arith.subf %401, %405 : vector<8x128xf32>
      %407 = arith.maximumf %393, %396 : vector<8x128xf32>
      %408 = arith.subf %393, %396 : vector<8x128xf32>
      %409 = math.absf %408 : vector<8x128xf32>
      %cst_121 = arith.constant 0.000000e+00 : f32
      %410 = vector.broadcast %cst_121 : f32 to vector<8x128xf32>
      %411 = arith.subf %410, %409 : vector<8x128xf32>
      %412 = math.exp %411 : vector<8x128xf32>
      %cst_122 = arith.constant 1.000000e+00 : f32
      %413 = vector.broadcast %cst_122 : f32 to vector<8x128xf32>
      %414 = arith.addf %413, %412 : vector<8x128xf32>
      %415 = math.log %414 : vector<8x128xf32>
      %416 = arith.addf %407, %415 : vector<8x128xf32>
      %417 = vector.extract_strided_slice %406 {offsets = [0, 0], sizes = [8, 1], strides = [1, 1]} : vector<8x128xf32> to vector<8x1xf32>
      %418 = vector.broadcast %417 : vector<8x1xf32> to vector<8x128xf32>
      %419 = arith.addf %416, %418 : vector<8x128xf32>
      %c0_i32_123 = arith.constant 0 : i32
      %420 = vector.broadcast %c0_i32_123 : i32 to vector<1x128xi32>
      %421 = arith.cmpi eq, %5, %420 : vector<1x128xi32>
      %c1_i32_124 = arith.constant 1 : i32
      %422 = tpu.dynamic_rotate %393 by %c1_i32_124 dim 1 : vector<8x128xf32>, i32 -> vector<8x128xf32>
      %cst_125 = arith.constant -1.000000e+30 : f32
      %423 = vector.shape_cast %421 : vector<1x128xi1> to vector<1x128xi1>
      %424 = vector.broadcast %423 : vector<1x128xi1> to vector<8x128xi1>
      %425 = vector.broadcast %cst_125 : f32 to vector<8x128xf32>
      %426 = arith.select %424, %425, %422 : vector<8x128xi1>, vector<8x128xf32>
      %c0_i32_126 = arith.constant 0 : i32
      %427 = vector.broadcast %c0_i32_126 : i32 to vector<1x128xi32>
      %428 = arith.cmpi eq, %5, %427 : vector<1x128xi32>
      %c1_i32_127 = arith.constant 1 : i32
      %429 = tpu.dynamic_rotate %396 by %c1_i32_127 dim 1 : vector<8x128xf32>, i32 -> vector<8x128xf32>
      %cst_128 = arith.constant -1.000000e+30 : f32
      %430 = vector.shape_cast %428 : vector<1x128xi1> to vector<1x128xi1>
      %431 = vector.broadcast %430 : vector<1x128xi1> to vector<8x128xi1>
      %432 = vector.broadcast %cst_128 : f32 to vector<8x128xf32>
      %433 = arith.select %431, %432, %429 : vector<8x128xi1>, vector<8x128xf32>
      %434 = arith.maximumf %396, %426 : vector<8x128xf32>
      %435 = arith.maximumf %434, %433 : vector<8x128xf32>
      %436 = arith.subf %396, %435 : vector<8x128xf32>
      %437 = math.exp %436 : vector<8x128xf32>
      %438 = arith.subf %426, %435 : vector<8x128xf32>
      %439 = math.exp %438 : vector<8x128xf32>
      %440 = arith.addf %437, %439 : vector<8x128xf32>
      %441 = arith.subf %433, %435 : vector<8x128xf32>
      %442 = math.exp %441 : vector<8x128xf32>
      %443 = arith.addf %440, %442 : vector<8x128xf32>
      %444 = math.log %443 : vector<8x128xf32>
      %445 = arith.addf %435, %444 : vector<8x128xf32>
      %446 = arith.addf %445, %406 : vector<8x128xf32>
      %447 = vector.broadcast %397 : i32 to vector<8x1xi32>
      %448 = arith.cmpi slt, %447, %2 : vector<8x1xi32>
      %449 = vector.shape_cast %448 : vector<8x1xi1> to vector<8x1xi1>
      %450 = vector.broadcast %449 : vector<8x1xi1> to vector<8x128xi1>
      %451 = arith.select %450, %419, %393 : vector<8x128xi1>, vector<8x128xf32>
      %452 = vector.shape_cast %448 : vector<8x1xi1> to vector<8x1xi1>
      %453 = vector.broadcast %452 : vector<8x1xi1> to vector<8x128xi1>
      %454 = arith.select %453, %446, %396 : vector<8x128xi1>, vector<8x128xf32>
      %c6_i32_129 = arith.constant 6 : i32
      %455 = arith.addi %106, %c6_i32_129 : i32
      %c23_i32_130 = arith.constant 23 : i32
      %456 = arith.minsi %455, %c23_i32_130 : i32
      %c0_131 = arith.constant 0 : index
      %457 = arith.index_cast %456 : i32 to index
      %c0_132 = arith.constant 0 : index
      %c0_133 = arith.constant 0 : index
      %458 = vector.load %arg2[%c0_131, %457, %c0_132, %c0_133] : memref<1x24x8x128xf32, #tpu.memory_space<vmem>>, vector<1x1x8x128xf32>
      %459 = vector.shape_cast %458 : vector<1x1x8x128xf32> to vector<8x128xf32>
      %460 = arith.index_cast %456 : i32 to index
      %c0_134 = arith.constant 0 : index
      %c0_135 = arith.constant 0 : index
      %461 = vector.load %arg6[%460, %c0_134, %c0_135] : memref<24x8x1xf32, #tpu.memory_space<vmem>>, vector<1x8x1xf32>
      %462 = vector.shape_cast %461 : vector<1x8x1xf32> to vector<8x1xf32>
      %463 = vector.broadcast %462 : vector<8x1xf32> to vector<8x128xf32>
      %464 = arith.subf %459, %463 : vector<8x128xf32>
      %465 = arith.maximumf %451, %454 : vector<8x128xf32>
      %466 = arith.subf %451, %454 : vector<8x128xf32>
      %467 = math.absf %466 : vector<8x128xf32>
      %cst_136 = arith.constant 0.000000e+00 : f32
      %468 = vector.broadcast %cst_136 : f32 to vector<8x128xf32>
      %469 = arith.subf %468, %467 : vector<8x128xf32>
      %470 = math.exp %469 : vector<8x128xf32>
      %cst_137 = arith.constant 1.000000e+00 : f32
      %471 = vector.broadcast %cst_137 : f32 to vector<8x128xf32>
      %472 = arith.addf %471, %470 : vector<8x128xf32>
      %473 = math.log %472 : vector<8x128xf32>
      %474 = arith.addf %465, %473 : vector<8x128xf32>
      %475 = vector.extract_strided_slice %464 {offsets = [0, 0], sizes = [8, 1], strides = [1, 1]} : vector<8x128xf32> to vector<8x1xf32>
      %476 = vector.broadcast %475 : vector<8x1xf32> to vector<8x128xf32>
      %477 = arith.addf %474, %476 : vector<8x128xf32>
      %c0_i32_138 = arith.constant 0 : i32
      %478 = vector.broadcast %c0_i32_138 : i32 to vector<1x128xi32>
      %479 = arith.cmpi eq, %5, %478 : vector<1x128xi32>
      %c1_i32_139 = arith.constant 1 : i32
      %480 = tpu.dynamic_rotate %451 by %c1_i32_139 dim 1 : vector<8x128xf32>, i32 -> vector<8x128xf32>
      %cst_140 = arith.constant -1.000000e+30 : f32
      %481 = vector.shape_cast %479 : vector<1x128xi1> to vector<1x128xi1>
      %482 = vector.broadcast %481 : vector<1x128xi1> to vector<8x128xi1>
      %483 = vector.broadcast %cst_140 : f32 to vector<8x128xf32>
      %484 = arith.select %482, %483, %480 : vector<8x128xi1>, vector<8x128xf32>
      %c0_i32_141 = arith.constant 0 : i32
      %485 = vector.broadcast %c0_i32_141 : i32 to vector<1x128xi32>
      %486 = arith.cmpi eq, %5, %485 : vector<1x128xi32>
      %c1_i32_142 = arith.constant 1 : i32
      %487 = tpu.dynamic_rotate %454 by %c1_i32_142 dim 1 : vector<8x128xf32>, i32 -> vector<8x128xf32>
      %cst_143 = arith.constant -1.000000e+30 : f32
      %488 = vector.shape_cast %486 : vector<1x128xi1> to vector<1x128xi1>
      %489 = vector.broadcast %488 : vector<1x128xi1> to vector<8x128xi1>
      %490 = vector.broadcast %cst_143 : f32 to vector<8x128xf32>
      %491 = arith.select %489, %490, %487 : vector<8x128xi1>, vector<8x128xf32>
      %492 = arith.maximumf %454, %484 : vector<8x128xf32>
      %493 = arith.maximumf %492, %491 : vector<8x128xf32>
      %494 = arith.subf %454, %493 : vector<8x128xf32>
      %495 = math.exp %494 : vector<8x128xf32>
      %496 = arith.subf %484, %493 : vector<8x128xf32>
      %497 = math.exp %496 : vector<8x128xf32>
      %498 = arith.addf %495, %497 : vector<8x128xf32>
      %499 = arith.subf %491, %493 : vector<8x128xf32>
      %500 = math.exp %499 : vector<8x128xf32>
      %501 = arith.addf %498, %500 : vector<8x128xf32>
      %502 = math.log %501 : vector<8x128xf32>
      %503 = arith.addf %493, %502 : vector<8x128xf32>
      %504 = arith.addf %503, %464 : vector<8x128xf32>
      %505 = vector.broadcast %455 : i32 to vector<8x1xi32>
      %506 = arith.cmpi slt, %505, %2 : vector<8x1xi32>
      %507 = vector.shape_cast %506 : vector<8x1xi1> to vector<8x1xi1>
      %508 = vector.broadcast %507 : vector<8x1xi1> to vector<8x128xi1>
      %509 = arith.select %508, %477, %451 : vector<8x128xi1>, vector<8x128xf32>
      %510 = vector.shape_cast %506 : vector<8x1xi1> to vector<8x1xi1>
      %511 = vector.broadcast %510 : vector<8x1xi1> to vector<8x128xi1>
      %512 = arith.select %511, %504, %454 : vector<8x128xi1>, vector<8x128xf32>
      %c7_i32_144 = arith.constant 7 : i32
      %513 = arith.addi %106, %c7_i32_144 : i32
      %c23_i32_145 = arith.constant 23 : i32
      %514 = arith.minsi %513, %c23_i32_145 : i32
      %c0_146 = arith.constant 0 : index
      %515 = arith.index_cast %514 : i32 to index
      %c0_147 = arith.constant 0 : index
      %c0_148 = arith.constant 0 : index
      %516 = vector.load %arg2[%c0_146, %515, %c0_147, %c0_148] : memref<1x24x8x128xf32, #tpu.memory_space<vmem>>, vector<1x1x8x128xf32>
      %517 = vector.shape_cast %516 : vector<1x1x8x128xf32> to vector<8x128xf32>
      %518 = arith.index_cast %514 : i32 to index
      %c0_149 = arith.constant 0 : index
      %c0_150 = arith.constant 0 : index
      %519 = vector.load %arg6[%518, %c0_149, %c0_150] : memref<24x8x1xf32, #tpu.memory_space<vmem>>, vector<1x8x1xf32>
      %520 = vector.shape_cast %519 : vector<1x8x1xf32> to vector<8x1xf32>
      %521 = vector.broadcast %520 : vector<8x1xf32> to vector<8x128xf32>
      %522 = arith.subf %517, %521 : vector<8x128xf32>
      %523 = arith.maximumf %509, %512 : vector<8x128xf32>
      %524 = arith.subf %509, %512 : vector<8x128xf32>
      %525 = math.absf %524 : vector<8x128xf32>
      %cst_151 = arith.constant 0.000000e+00 : f32
      %526 = vector.broadcast %cst_151 : f32 to vector<8x128xf32>
      %527 = arith.subf %526, %525 : vector<8x128xf32>
      %528 = math.exp %527 : vector<8x128xf32>
      %cst_152 = arith.constant 1.000000e+00 : f32
      %529 = vector.broadcast %cst_152 : f32 to vector<8x128xf32>
      %530 = arith.addf %529, %528 : vector<8x128xf32>
      %531 = math.log %530 : vector<8x128xf32>
      %532 = arith.addf %523, %531 : vector<8x128xf32>
      %533 = vector.extract_strided_slice %522 {offsets = [0, 0], sizes = [8, 1], strides = [1, 1]} : vector<8x128xf32> to vector<8x1xf32>
      %534 = vector.broadcast %533 : vector<8x1xf32> to vector<8x128xf32>
      %535 = arith.addf %532, %534 : vector<8x128xf32>
      %c0_i32_153 = arith.constant 0 : i32
      %536 = vector.broadcast %c0_i32_153 : i32 to vector<1x128xi32>
      %537 = arith.cmpi eq, %5, %536 : vector<1x128xi32>
      %c1_i32_154 = arith.constant 1 : i32
      %538 = tpu.dynamic_rotate %509 by %c1_i32_154 dim 1 : vector<8x128xf32>, i32 -> vector<8x128xf32>
      %cst_155 = arith.constant -1.000000e+30 : f32
      %539 = vector.shape_cast %537 : vector<1x128xi1> to vector<1x128xi1>
      %540 = vector.broadcast %539 : vector<1x128xi1> to vector<8x128xi1>
      %541 = vector.broadcast %cst_155 : f32 to vector<8x128xf32>
      %542 = arith.select %540, %541, %538 : vector<8x128xi1>, vector<8x128xf32>
      %c0_i32_156 = arith.constant 0 : i32
      %543 = vector.broadcast %c0_i32_156 : i32 to vector<1x128xi32>
      %544 = arith.cmpi eq, %5, %543 : vector<1x128xi32>
      %c1_i32_157 = arith.constant 1 : i32
      %545 = tpu.dynamic_rotate %512 by %c1_i32_157 dim 1 : vector<8x128xf32>, i32 -> vector<8x128xf32>
      %cst_158 = arith.constant -1.000000e+30 : f32
      %546 = vector.shape_cast %544 : vector<1x128xi1> to vector<1x128xi1>
      %547 = vector.broadcast %546 : vector<1x128xi1> to vector<8x128xi1>
      %548 = vector.broadcast %cst_158 : f32 to vector<8x128xf32>
      %549 = arith.select %547, %548, %545 : vector<8x128xi1>, vector<8x128xf32>
      %550 = arith.maximumf %512, %542 : vector<8x128xf32>
      %551 = arith.maximumf %550, %549 : vector<8x128xf32>
      %552 = arith.subf %512, %551 : vector<8x128xf32>
      %553 = math.exp %552 : vector<8x128xf32>
      %554 = arith.subf %542, %551 : vector<8x128xf32>
      %555 = math.exp %554 : vector<8x128xf32>
      %556 = arith.addf %553, %555 : vector<8x128xf32>
      %557 = arith.subf %549, %551 : vector<8x128xf32>
      %558 = math.exp %557 : vector<8x128xf32>
      %559 = arith.addf %556, %558 : vector<8x128xf32>
      %560 = math.log %559 : vector<8x128xf32>
      %561 = arith.addf %551, %560 : vector<8x128xf32>
      %562 = arith.addf %561, %522 : vector<8x128xf32>
      %563 = vector.broadcast %513 : i32 to vector<8x1xi32>
      %564 = arith.cmpi slt, %563, %2 : vector<8x1xi32>
      %565 = vector.shape_cast %564 : vector<8x1xi1> to vector<8x1xi1>
      %566 = vector.broadcast %565 : vector<8x1xi1> to vector<8x128xi1>
      %567 = arith.select %566, %535, %509 : vector<8x128xi1>, vector<8x128xf32>
      %568 = vector.shape_cast %564 : vector<8x1xi1> to vector<8x1xi1>
      %569 = vector.broadcast %568 : vector<8x1xi1> to vector<8x128xi1>
      %570 = arith.select %569, %562, %512 : vector<8x128xi1>, vector<8x128xf32>
      scf.yield %567, %570 : vector<8x128xf32>, vector<8x128xf32>
    }
    %62 = vector.broadcast %5 : vector<1x128xi32> to vector<8x128xi32>
    %63 = vector.broadcast %1 : vector<8x1xi32> to vector<8x128xi32>
    %64 = arith.cmpi eq, %62, %63 : vector<8x128xi32>
    %cst_22 = arith.constant -1.000000e+30 : f32
    %65 = vector.broadcast %cst_22 : f32 to vector<8x128xf32>
    %66 = arith.select %64, %61#0, %65 : vector<8x128xi1>, vector<8x128xf32>
    %cst_23 = arith.constant dense<0xFF800000> : vector<8xf32>
    %67 = vector.multi_reduction <maximumf>, %66, %cst_23 [1] : vector<8x128xf32> to vector<8xf32>
    %68 = vector.shape_cast %67 : vector<8xf32> to vector<8x1xf32>
    %cst_24 = arith.constant -1.000000e+30 : f32
    %69 = vector.broadcast %cst_24 : f32 to vector<8x128xf32>
    %70 = arith.select %64, %61#1, %69 : vector<8x128xi1>, vector<8x128xf32>
    %cst_25 = arith.constant dense<0xFF800000> : vector<8xf32>
    %71 = vector.multi_reduction <maximumf>, %70, %cst_25 [1] : vector<8x128xf32> to vector<8xf32>
    %72 = vector.shape_cast %71 : vector<8xf32> to vector<8x1xf32>
    %73 = arith.maximumf %68, %72 : vector<8x1xf32>
    %74 = arith.subf %68, %72 : vector<8x1xf32>
    %75 = math.absf %74 : vector<8x1xf32>
    %cst_26 = arith.constant 0.000000e+00 : f32
    %76 = vector.broadcast %cst_26 : f32 to vector<8x1xf32>
    %77 = arith.subf %76, %75 : vector<8x1xf32>
    %78 = math.exp %77 : vector<8x1xf32>
    %cst_27 = arith.constant 1.000000e+00 : f32
    %79 = vector.broadcast %cst_27 : f32 to vector<8x1xf32>
    %80 = arith.addf %79, %78 : vector<8x1xf32>
    %81 = math.log %80 : vector<8x1xf32>
    %82 = arith.addf %73, %81 : vector<8x1xf32>
    %cst_28 = arith.constant 0.000000e+00 : f32
    %83 = vector.broadcast %cst_28 : f32 to vector<8x1xf32>
    %84 = arith.subf %83, %82 : vector<8x1xf32>
    %cst_29 = arith.constant 1.000000e+29 : f32
    %85 = vector.broadcast %cst_29 : f32 to vector<8x1xf32>
    %86 = arith.cmpf olt, %84, %85 : vector<8x1xf32>
    %cst_30 = arith.constant 0.000000e+00 : f32
    %87 = vector.broadcast %cst_30 : f32 to vector<8x1xf32>
    %88 = arith.select %86, %84, %87 : vector<8x1xi1>, vector<8x1xf32>
    %c0_i32_31 = arith.constant 0 : i32
    %89 = vector.broadcast %c0_i32_31 : i32 to vector<8x1xi32>
    %90 = arith.cmpi sgt, %1, %89 : vector<8x1xi32>
    %c0_i32_32 = arith.constant 0 : i32
    %91 = vector.broadcast %c0_i32_32 : i32 to vector<8x1xi32>
    %92 = arith.cmpi sgt, %2, %91 : vector<8x1xi32>
    %93 = arith.andi %90, %92 : vector<8x1xi1>
    %c1_i32_33 = arith.constant 1 : i32
    %94 = vector.broadcast %c1_i32_33 : i32 to vector<8x1xi32>
    %95 = arith.maxsi %1, %94 : vector<8x1xi32>
    %96 = arith.sitofp %95 : vector<8x1xi32> to vector<8x1xf32>
    %97 = arith.divf %88, %96 : vector<8x1xf32>
    %cst_34 = arith.constant 0.000000e+00 : f32
    %98 = vector.broadcast %cst_34 : f32 to vector<8x1xf32>
    %99 = arith.select %93, %97, %98 : vector<8x1xi1>, vector<8x1xf32>
    %100 = vector.shape_cast %99 : vector<8x1xf32> to vector<8x1xf32>
    %101 = vector.broadcast %100 : vector<8x1xf32> to vector<8x128xf32>
    %c0_35 = arith.constant 0 : index
    %c0_36 = arith.constant 0 : index
    %c0_37 = arith.constant 0 : index
    %102 = vector.load %arg5[%c0_35, %c0_36, %c0_37] : memref<1x8x128xf32, #tpu.memory_space<vmem>>, vector<1x8x128xf32>
    %103 = vector.shape_cast %102 : vector<1x8x128xf32> to vector<8x128xf32>
    %104 = vector.shape_cast %101 : vector<8x128xf32> to vector<1x8x128xf32>
    tpu.vector_store %arg5[%c0_35, %c0_36, %c0_37], %104 {strides = array<i32>} : memref<1x8x128xf32, #tpu.memory_space<vmem>>, vector<1x8x128xf32>,
    return
  }
  func.func @transform_0(%arg0: i32, %arg1: memref<16xi32, #tpu.memory_space<smem>>) -> (i32, i32, i32, i32) {
    %c0_i32 = arith.constant 0 : i32
    %c0_i32_0 = arith.constant 0 : i32
    %c0_i32_1 = arith.constant 0 : i32
    %c0_i32_2 = arith.constant 0 : i32
    return %arg0, %c0_i32, %c0_i32_0, %c0_i32_1 : i32, i32, i32, i32
  }
  func.func @transform_1(%arg0: i32, %arg1: memref<16xi32, #tpu.memory_space<smem>>) -> (i32, i32) {
    %c0_i32 = arith.constant 0 : i32
    %c0_i32_0 = arith.constant 0 : i32
    return %arg0, %c0_i32 : i32, i32
  }
  func.func @transform_2(%arg0: i32, %arg1: memref<16xi32, #tpu.memory_space<smem>>) -> (i32, i32) {
    %c0_i32 = arith.constant 0 : i32
    %c0_i32_0 = arith.constant 0 : i32
    return %arg0, %c0_i32 : i32, i32
  }
  func.func @transform_3(%arg0: i32, %arg1: memref<16xi32, #tpu.memory_space<smem>>) -> (i32, i32, i32) {
    %c0_i32 = arith.constant 0 : i32
    %c0_i32_0 = arith.constant 0 : i32
    %c0_i32_1 = arith.constant 0 : i32
    return %arg0, %c0_i32, %c0_i32_0 : i32, i32, i32
  }
}

</mosaic_0001>

<llo_original>
// kernel: tpu_custom_call.1
$region0: #{tpu_custom_call.1}
  #allocation0 [shape = 'u32[]', space=smem, size = 0x4, offset = 0x4, fixed_abs, tag = 'smem constant byte address 0x4 - core index']
  #allocation1 [shape = 'u32[144,128]{1,0:T(1,128)}', space=vmem, size = 0x12000, scoped, tag = 'internal scratch']
  #allocation2 [shape = 'f32[24,8,1]{2,1,0:T(8,128)}', space=vmem, size = 0x18000, scoped, tag = 'scratch operand']
  #allocation3 [shape = 's32[1]{0}', space=sflag, size = 0x4, scoped, tag = 'scoped memory for tpu_custom_call.1']
  #allocation4 [shape = 'u8[512]{0}', space=smem, size = 0x200, scoped, tag = 'prefetched SMEM operand 0']
  %s0 = inlined_call_operand.vmem [shape: s32[16], index: 0, kind: input, shape index: {}]
  %s1 = inlined_call_operand.hbm [shape: f32[2,24,8,128], index: 1, kind: input, shape index: {}]
  %s2 = inlined_call_operand.vmem [shape: s32[16,1], index: 2, kind: input, shape index: {}]
  %s3 = inlined_call_operand.vmem [shape: s32[16,1], index: 3, kind: input, shape index: {}]
  %s4 = inlined_call_operand.hbm [shape: f32[2,8,128], index: 4, kind: output, shape index: {}]
  %s5 = sld [smem:[#allocation0]]
  $region63: #{tpu_custom_call.1} parent=0
    _
  %s7 = ssub.s32 1, %s5
  %s8 = scalar_select 0, %s7, %s5
  %s9 = sshll.u32 %s0, 4
  %s10 = int_to_ptr.vmem [resolvable:$true] %s9
  %12 = dma.vmem_to_smem %s10, 16, [#allocation4], [#allocation3]
  %13 = dma.done [#allocation3], 16
  %14 = sfence
  $region1: #{tpu_custom_call.1} parent=0
    #allocation5 [shape = 'u8[196608]{0}', space=vmem, size = 0x30000, scoped, tag = 'input window, operand 1']
    #allocation6 [shape = 's32[2]{0}', space=sflag, size = 0x8, scoped, tag = 'scoped memory for tpu_custom_call.1']
    #allocation7 [shape = 's32[2]{0}', space=sflag, size = 0x8, scoped, tag = 'scoped memory for tpu_custom_call.1']
    #allocation8 [shape = 'u8[8192]{0}', space=vmem, size = 0x2000, scoped, tag = 'output window, operand 0']
    %15 = vsyncpa [#allocation6], 0
    %s16 = scalar_lea.sflag [#allocation6], 1
    %17 = vsyncpa %s16, 0
    %18 = vsyncpa [#allocation7], 0
    %s19 = scalar_lea.sflag [#allocation7], 1
    %20 = vsyncpa %s19, 0
    loop: start=0, step=1, limit=4
    $region2: #{tpu_custom_call.1} parent=1 // loop_pre_header
      _
    $region3: #{tpu_custom_call.1} parent=1 // loop_header
      %s22 = sphi 0, %s26
      %p23 = scmp.ge.s32.totalorder %s22, 4
      %s32 = sphi 0, %s34
      %s35 = sphi 0, %s32
      %s36 = sphi 0, %s35
      %s52 = sphi 0, %s36
      %s58 = sphi 0, %s60
      %s61 = sphi 0, %s58
      %s62 = sphi 0, %s61
      %s78 = sphi 0, %s62
      %s84 = sphi 0, %s86
      %s87 = sphi 0, %s84
      %s88 = sphi 0, %s87
      %s104 = sphi 0, %s88
      %s110 = sphi 0, %s112
      %s113 = sphi 0, %s110
      %s114 = sphi 0, %s113
      %s130 = sphi 0, %s114
    $region4: #{tpu_custom_call.1} parent=1 // loop_header_branch
      %25 = sbr.rel (%p23) target = $region8
    $region5: #{tpu_custom_call.1} parent=1 // loop_body
      %s27 = ssub.s32 %s22, 1
      %s28 = ssub.s32 %s22, 2
      %s29 = sadd.s32 %s22, 1
      %s30 = ssub.s32 %s22, %s29
      %p31 = scmp.eq.s32.totalorder %s30, 0
      %s33 = sadd.s32 %s32, 1
      %s34 = scalar_select %p31, %s32, %s33
      %p37 = pneg %p31
      %p38 = scmp.eq.s32.totalorder %s22, 1
      %p39 = por %p37, %p38
      %p40 = scmp.ne.s32.totalorder %s32, %s35
      %p41 = scmp.eq.s32.totalorder %s22, 0
      %p42 = por %p40, %p41
      %p43 = scmp.ne.s32.totalorder %s32, %s35
      %p44 = scmp.eq.s32.totalorder %s27, 1
      %p45 = por %p43, %p44
      %p46 = scmp.ne.s32.totalorder %s35, %s36
      %p47 = scmp.eq.s32.totalorder %s27, 0
      %p48 = por %p46, %p47
      %p49 = scmp.ne.s32.totalorder %s35, %s36
      %p50 = scmp.eq.s32.totalorder %s28, 1
      %p51 = por %p49, %p50
      %p53 = scmp.ne.s32.totalorder %s36, %s52
      %p54 = scmp.eq.s32.totalorder %s28, 0
      %p55 = por %p53, %p54
      %s56 = ssub.s32 %s22, %s29
      %p57 = scmp.eq.s32.totalorder %s56, 0
      %s59 = sadd.s32 %s58, 1
      %s60 = scalar_select %p57, %s58, %s59
      %p63 = pneg %p57
      %p64 = scmp.eq.s32.totalorder %s22, 1
      %p65 = por %p63, %p64
      %p66 = scmp.ne.s32.totalorder %s58, %s61
      %p67 = scmp.eq.s32.totalorder %s22, 0
      %p68 = por %p66, %p67
      %p69 = scmp.ne.s32.totalorder %s58, %s61
      %p70 = scmp.eq.s32.totalorder %s27, 1
      %p71 = por %p69, %p70
      %p72 = scmp.ne.s32.totalorder %s61, %s62
      %p73 = scmp.eq.s32.totalorder %s27, 0
      %p74 = por %p72, %p73
      %p75 = scmp.ne.s32.totalorder %s61, %s62
      %p76 = scmp.eq.s32.totalorder %s28, 1
      %p77 = por %p75, %p76
      %p79 = scmp.ne.s32.totalorder %s62, %s78
      %p80 = scmp.eq.s32.totalorder %s28, 0
      %p81 = por %p79, %p80
      %s82 = ssub.s32 %s22, %s29
      %p83 = scmp.eq.s32.totalorder %s82, 0
      %s85 = sadd.s32 %s84, 1
      %s86 = scalar_select %p83, %s84, %s85
      %p89 = pneg %p83
      %p90 = scmp.eq.s32.totalorder %s22, 1
      %p91 = por %p89, %p90
      %p92 = scmp.ne.s32.totalorder %s84, %s87
      %p93 = scmp.eq.s32.totalorder %s22, 0
      %p94 = por %p92, %p93
      %p95 = scmp.ne.s32.totalorder %s84, %s87
      %p96 = scmp.eq.s32.totalorder %s27, 1
      %p97 = por %p95, %p96
      %p98 = scmp.ne.s32.totalorder %s87, %s88
      %p99 = scmp.eq.s32.totalorder %s27, 0
      %p100 = por %p98, %p99
      %p101 = scmp.ne.s32.totalorder %s87, %s88
      %p102 = scmp.eq.s32.totalorder %s28, 1
      %p103 = por %p101, %p102
      %p105 = scmp.ne.s32.totalorder %s88, %s104
      %p106 = scmp.eq.s32.totalorder %s28, 0
      %p107 = por %p105, %p106
      %s108 = ssub.s32 %s22, %s29
      %p109 = scmp.eq.s32.totalorder %s108, 0
      %s111 = sadd.s32 %s110, 1
      %s112 = scalar_select %p109, %s110, %s111
      %p115 = pneg %p109
      %p116 = scmp.eq.s32.totalorder %s22, 1
      %p117 = por %p115, %p116
      %p118 = scmp.ne.s32.totalorder %s110, %s113
      %p119 = scmp.eq.s32.totalorder %s22, 0
      %p120 = por %p118, %p119
      %p121 = scmp.ne.s32.totalorder %s110, %s113
      %p122 = scmp.eq.s32.totalorder %s27, 1
      %p123 = por %p121, %p122
      %p124 = scmp.ne.s32.totalorder %s113, %s114
      %p125 = scmp.eq.s32.totalorder %s27, 0
      %p126 = por %p124, %p125
      %p127 = scmp.ne.s32.totalorder %s113, %s114
      %p128 = scmp.eq.s32.totalorder %s28, 1
      %p129 = por %p127, %p128
      %p131 = scmp.ne.s32.totalorder %s114, %s130
      %p132 = scmp.eq.s32.totalorder %s28, 0
      %p133 = por %p131, %p132
      %p134 = scmp.le.s32.totalorder 1, %s22
      %p135 = scmp.lt.s32.totalorder %s22, 3
      %p136 = pnand %p134, %p135
      %p137 = pneg %p136
      // Predicated region
      $region9: #{tpu_custom_call.1} parent=5 // pred_check
        _
      $region10: #{tpu_custom_call.1} parent=5 // pred_check_branch
        %139 = sbr.rel (%p136) target = $region12
      $region11: #{tpu_custom_call.1} parent=5 // pred_region
        %s140 = ssub.s32 %s22, 1
      $region12: #{tpu_custom_call.1} parent=5 // pred_fallthru
        _
      %p141 = scmp.lt.s32.totalorder %s22, 2
      // Predicated region
      $region13: #{tpu_custom_call.1} parent=5 // pred_check
        %p142 = pneg %p141
      $region14: #{tpu_custom_call.1} parent=5 // pred_check_branch
        %144 = sbr.rel (%p142) target = $region16
      $region15: #{tpu_custom_call.1} parent=5 // pred_region
        // Predicated region
        $region17: #{tpu_custom_call.1} parent=15 // pred_check
          %p145 = pneg %p42
        $region18: #{tpu_custom_call.1} parent=15 // pred_check_branch
          %147 = sbr.rel (%p145) target = $region20
        $region19: #{tpu_custom_call.1} parent=15 // pred_region
          %s148 = sand.u32 %s32, 1
          %s149 = scalar_lea.sflag [#allocation6], %s148
          %s150 = sand.u32 %s32, 1
          %s151 = smul.addr %s150, 192
          %s152 = scalar_lea.vmem [#allocation5], %s151
          %s154 = ssub.s32 3072, 3072
          %155 = vsyncadd %s149, %s154
          %s156 = smul.addr %s22, 24
          %s157 = smul.addr %s156, 128
          %s158 = scalar_lea.hbm %s1, %s157
          %s159 = sshll.u32 %s152, 4
          %s160 = int_to_ptr.vmem [resolvable:$true] %s159
          %165 = dma.hbm_to_vmem [thread:$0]  %s158, 3072, %s160, %s149, 128, 128, 8
        $region20: #{tpu_custom_call.1} parent=15 // pred_fallthru
          _
        // Predicated region
        $region21: #{tpu_custom_call.1} parent=15 // pred_check
          %p166 = pneg %p68
        $region22: #{tpu_custom_call.1} parent=15 // pred_check_branch
          %168 = sbr.rel (%p166) target = $region24
        $region23: #{tpu_custom_call.1} parent=15 // pred_region
          %p169 = scmp.lt.s32.totalorder %s22, 1
          %s170 = scalar_select %p169, %s22, 1
          %s171 = smul.addr %s170, 8
          %s172 = scalar_lea.vmem %s2, %s171
        $region24: #{tpu_custom_call.1} parent=15 // pred_fallthru
          _
        // Predicated region
        $region25: #{tpu_custom_call.1} parent=15 // pred_check
          %p173 = pneg %p94
        $region26: #{tpu_custom_call.1} parent=15 // pred_check_branch
          %175 = sbr.rel (%p173) target = $region28
        $region27: #{tpu_custom_call.1} parent=15 // pred_region
          %p176 = scmp.lt.s32.totalorder %s22, 1
          %s177 = scalar_select %p176, %s22, 1
          %s178 = smul.addr %s177, 8
          %s179 = scalar_lea.vmem %s3, %s178
        $region28: #{tpu_custom_call.1} parent=15 // pred_fallthru
          _
      $region16: #{tpu_custom_call.1} parent=5 // pred_fallthru
        _
      %p180 = scmp.le.s32.totalorder 1, %s22
      %p181 = scmp.lt.s32.totalorder %s22, 3
      %p182 = pnand %p180, %p181
      %p183 = pneg %p182
      // Predicated region
      $region29: #{tpu_custom_call.1} parent=5 // pred_check
        _
      $region30: #{tpu_custom_call.1} parent=5 // pred_check_branch
        %185 = sbr.rel (%p182) target = $region32
      $region31: #{tpu_custom_call.1} parent=5 // pred_region
        %s186 = ssub.s32 %s22, 1
        %s187 = sand.u32 %s35, 1
        %s188 = scalar_lea.sflag [#allocation6], %s187
        %s189 = sand.u32 %s35, 1
        %s190 = smul.addr %s189, 192
        %s191 = scalar_lea.vmem [#allocation5], %s190
        // Predicated region
        $region33: #{tpu_custom_call.1} parent=31 // pred_check
          %p192 = pneg %p48
        $region34: #{tpu_custom_call.1} parent=31 // pred_check_branch
          %194 = sbr.rel (%p192) target = $region36
        $region35: #{tpu_custom_call.1} parent=31 // pred_region
          %195 = dma.done %s188, 3072
        $region36: #{tpu_custom_call.1} parent=31 // pred_fallthru
          _
        %s196 = sand.u32 %s35, 1
        %s197 = scalar_lea.sflag [#allocation6], %s196
        %s198 = sand.u32 %s35, 1
        %s199 = smul.addr %s198, 192
        %s200 = scalar_lea.vmem [#allocation5], %s199
        %p201 = pneg %p48
        %p202 = pneg %p45
        %p203 = scmp.lt.s32.totalorder %s27, 1
        %s204 = scalar_select %p203, %s27, 1
        %s205 = smul.addr %s204, 8
        %s206 = scalar_lea.vmem %s2, %s205
        %p207 = pneg %p74
        %p208 = pneg %p71
        %p209 = scmp.lt.s32.totalorder %s27, 1
        %s210 = scalar_select %p209, %s27, 1
        %s211 = smul.addr %s210, 8
        %s212 = scalar_lea.vmem %s3, %s211
        %p213 = pneg %p100
        %p214 = pneg %p97
        %p215 = pneg %p126
        %p216 = pneg %p123
        %s217 = sand.u32 %s113, 1
        %s218 = scalar_lea.sflag [#allocation7], %s217
        %s219 = sand.u32 %s113, 1
        %s220 = smul.addr %s219, 8
        %s221 = scalar_lea.vmem [#allocation8], %s220
        %p222 = scmp.lt.s32.totalorder %s27, 1
        %s223 = scalar_select %p222, %s27, 1
        %s224 = smul.addr %s223, 8
        %s225 = scalar_lea.vmem %s2, %s224
        %p226 = scmp.lt.s32.totalorder %s27, 1
        %s227 = scalar_select %p226, %s27, 1
        %s228 = smul.addr %s227, 8
        %s229 = scalar_lea.vmem %s3, %s228
        %s230 = smul.u32 %s27, 8
        %v231 = vld [vmem:[%s225] sm:$0xff]
        %v232 = vld [vmem:[%s229] sm:$0xff]
        %v233 = vlaneseq
        %v234 = vand.u32 %v233, 127
        loop: start=0, step=1, limit=3
        $region37: #{tpu_custom_call.1} parent=31 // loop_pre_header
          _
        $region38: #{tpu_custom_call.1} parent=31 // loop_header
          %s236 = sphi 0, %s240
          %p237 = scmp.ge.s32.totalorder %s236, 3
        $region39: #{tpu_custom_call.1} parent=31 // loop_header_branch
          %239 = sbr.rel (%p237) target = $region43
        $region40: #{tpu_custom_call.1} parent=31 // loop_body
          %s241 = smul.u32 %s236, 8
          %s242 = smul.u32 %s241, 8
          %s243 = scalar_lea.vmem %s191, %s242 [#allocation5]
          %v244 = vld [vmem:[%s243] sm:$0xff]
          %v245 = vld [vmem:[%s243 + $0x8] sm:$0xff]
          %v246 = vld [vmem:[%s243 + $0x10] sm:$0xff]
          %v247 = vld [vmem:[%s243 + $0x18] sm:$0xff]
          %v248 = vld [vmem:[%s243 + $0x20] sm:$0xff]
          %v249 = vld [vmem:[%s243 + $0x28] sm:$0xff]
          %v250 = vld [vmem:[%s243 + $0x30] sm:$0xff]
          %v251 = vld [vmem:[%s243 + $0x38] sm:$0xff]
          %252 = vset.pattern.permute.xlu0 0
          %253 = vperm.xlu0 %252, %v231
          %v254 = vpop.permute.xlu0 %253
          %vm255 = vcmp.gt.s32.totalorder %v234, %v254
          %v256 = vsel %vm255, -1e+15, %v244
          %v257 = vsel %vm255, -1e+15, %v245
          %v258 = vsel %vm255, -1e+15, %v246
          %v259 = vsel %vm255, -1e+15, %v247
          %v260 = vsel %vm255, -1e+15, %v248
          %v261 = vsel %vm255, -1e+15, %v249
          %v262 = vsel %vm255, -1e+15, %v250
          %v263 = vsel %vm255, -1e+15, %v251
          %264 = vmax.xlane.f32.xlu0 %v256
          %v265 = vpop.xlane.xlu0 %264
          %266 = vmax.xlane.f32.xlu0 %v257
          %v267 = vpop.xlane.xlu0 %266
          %268 = vmax.xlane.f32.xlu0 %v258
          %v269 = vpop.xlane.xlu0 %268
          %270 = vmax.xlane.f32.xlu0 %v259
          %v271 = vpop.xlane.xlu0 %270
          %272 = vmax.xlane.f32.xlu0 %v260
          %v273 = vpop.xlane.xlu0 %272
          %274 = vmax.xlane.f32.xlu0 %v261
          %v275 = vpop.xlane.xlu0 %274
          %276 = vmax.xlane.f32.xlu0 %v262
          %v277 = vpop.xlane.xlu0 %276
          %278 = vmax.xlane.f32.xlu0 %v263
          %v279 = vpop.xlane.xlu0 %278
          %v280 = vsub.f32 %v256, %v265
          %v281 = vsub.f32 %v257, %v267
          %v282 = vsub.f32 %v258, %v269
          %v283 = vsub.f32 %v259, %v271
          %v284 = vsub.f32 %v260, %v273
          %v285 = vsub.f32 %v261, %v275
          %v286 = vsub.f32 %v262, %v277
          %v287 = vsub.f32 %v263, %v279
          %v288 = vmul.f32 %v280, 1.442695
          %v289 = vpow.pop %v288
          %v290 = vmul.f32 %v281, 1.442695
          %v291 = vpow.pop %v290
          %v292 = vmul.f32 %v282, 1.442695
          %v293 = vpow.pop %v292
          %v294 = vmul.f32 %v283, 1.442695
          %v295 = vpow.pop %v294
          %v296 = vmul.f32 %v284, 1.442695
          %v297 = vpow.pop %v296
          %v298 = vmul.f32 %v285, 1.442695
          %v299 = vpow.pop %v298
          %v300 = vmul.f32 %v286, 1.442695
          %v301 = vpow.pop %v300
          %v302 = vmul.f32 %v287, 1.442695
          %v303 = vpow.pop %v302
          %304 = vadd.xlane.f32.xlu0 %v289
          %v305 = vpop.xlane.xlu0 %304
          %306 = vadd.xlane.f32.xlu0 %v291
          %v307 = vpop.xlane.xlu0 %306
          %308 = vadd.xlane.f32.xlu0 %v293
          %v309 = vpop.xlane.xlu0 %308
          %310 = vadd.xlane.f32.xlu0 %v295
          %v311 = vpop.xlane.xlu0 %310
          %312 = vadd.xlane.f32.xlu0 %v297
          %v313 = vpop.xlane.xlu0 %312
          %314 = vadd.xlane.f32.xlu0 %v299
          %v315 = vpop.xlane.xlu0 %314
          %316 = vadd.xlane.f32.xlu0 %v301
          %v317 = vpop.xlane.xlu0 %316
          %318 = vadd.xlane.f32.xlu0 %v303
          %v319 = vpop.xlane.xlu0 %318
          %v320 = vlog2.pop %v305
          %v321 = vmul.f32 %v320, 0.6931472
          %v322 = vlog2.pop %v307
          %v323 = vmul.f32 %v322, 0.6931472
          %v324 = vlog2.pop %v309
          %v325 = vmul.f32 %v324, 0.6931472
          %v326 = vlog2.pop %v311
          %v327 = vmul.f32 %v326, 0.6931472
          %v328 = vlog2.pop %v313
          %v329 = vmul.f32 %v328, 0.6931472
          %v330 = vlog2.pop %v315
          %v331 = vmul.f32 %v330, 0.6931472
          %v332 = vlog2.pop %v317
          %v333 = vmul.f32 %v332, 0.6931472
          %v334 = vlog2.pop %v319
          %v335 = vmul.f32 %v334, 0.6931472
          %v336 = vadd.f32 %v265, %v321
          %v337 = vadd.f32 %v267, %v323
          %v338 = vadd.f32 %v269, %v325
          %v339 = vadd.f32 %v271, %v327
          %v340 = vadd.f32 %v273, %v329
          %v341 = vadd.f32 %v275, %v331
          %v342 = vadd.f32 %v277, %v333
          %v343 = vadd.f32 %v279, %v335
          %s344 = scalar_lea.vmem [#allocation2], %s242
          %vm345 = vcmask 7168
          %346 = vst.msk [vmem:[%s344] sm:$0xff] %vm345, %v336
          %347 = vst.msk [vmem:[%s344 + $0x8] sm:$0xff] %vm345, %v337
          %348 = vst.msk [vmem:[%s344 + $0x10] sm:$0xff] %vm345, %v338
          %349 = vst.msk [vmem:[%s344 + $0x18] sm:$0xff] %vm345, %v339
          %350 = vst.msk [vmem:[%s344 + $0x20] sm:$0xff] %vm345, %v340
          %351 = vst.msk [vmem:[%s344 + $0x28] sm:$0xff] %vm345, %v341
          %352 = vst.msk [vmem:[%s344 + $0x30] sm:$0xff] %vm345, %v342
          %353 = vst.msk [vmem:[%s344 + $0x38] sm:$0xff] %vm345, %v343
        $region41: #{tpu_custom_call.1} parent=31 // loop_footer
          %s240 = sadd.s32 1, %s236
        $region42: #{tpu_custom_call.1} parent=31 // loop_footer_branch
          %235 = sbr.rel target = $region38
        $region43: #{tpu_custom_call.1} parent=31 // loop_exit
          _
        %v354 = vld [vmem:[%s191] sm:$0xff]
        %v355 = vld [vmem:[#allocation2] sm:$0xff]
        %357 = vset.pattern.permute.xlu0 0
        %358 = vperm.xlu0 %357, %v355
        %v359 = vpop.permute.xlu0 %358
        %v361 = vsub.f32 %v354, %v359
        %vm362 = vcmp.eq.s32.totalorder %v234, 0
        %v363 = vsel %vm362, 1, 0
        %vm364 = vcmp.eq.s32.totalorder %v363, 1
        %v365 = vsel %vm364, %v361, -1e+30
        %vm366 = vcmp.eq.s32.totalorder %v234, 1
        %v367 = vsel %vm366, 1, 0
        %vm368 = vcmp.eq.s32.totalorder %v367, 1
        %v369 = vsel %vm368, %v361, -1e+30
        %s370 = sld [smem:[#allocation4 + %s230]]
        %s371 = sadd.s32 %s230, 1
        %s372 = sld [smem:[#allocation4 + %s371]]
        %p373 = scmp.gt.s32.totalorder %s370, %s372
        %s374 = scalar_select %p373, %s370, %s372
        %s375 = sadd.s32 %s230, 2
        %s376 = sld [smem:[#allocation4 + %s375]]
        %p377 = scmp.gt.s32.totalorder %s374, %s376
        %s378 = scalar_select %p377, %s374, %s376
        %s379 = sadd.s32 %s230, 3
        %s380 = sld [smem:[#allocation4 + %s379]]
        %p381 = scmp.gt.s32.totalorder %s378, %s380
        %s382 = scalar_select %p381, %s378, %s380
        %s383 = sadd.s32 %s230, 4
        %s384 = sld [smem:[#allocation4 + %s383]]
        %p385 = scmp.gt.s32.totalorder %s382, %s384
        %s386 = scalar_select %p385, %s382, %s384
        %s387 = sadd.s32 %s230, 5
        %s388 = sld [smem:[#allocation4 + %s387]]
        %p389 = scmp.gt.s32.totalorder %s386, %s388
        %s390 = scalar_select %p389, %s386, %s388
        %s391 = sadd.s32 %s230, 6
        %s392 = sld [smem:[#allocation4 + %s391]]
        %p393 = scmp.gt.s32.totalorder %s390, %s392
        %s394 = scalar_select %p393, %s390, %s392
        %s395 = sadd.s32 %s230, 7
        %s396 = sld [smem:[#allocation4 + %s395]]
        %p397 = scmp.gt.s32.totalorder %s394, %s396
        %s398 = scalar_select %p397, %s394, %s396
        %p399 = scmp.lt.s32.totalorder %s398, 24
        %s400 = scalar_select %p399, %s398, 24
        %s401 = ssub.s32 %s400, 1
        %p402 = scmp.gt.s32.totalorder %s401, 0
        %s403 = scalar_select %p402, %s401, 0
        %s404 = sadd.s32 %s403, 7
        %p405 = scmp.lt.s32.totalorder %s404, 0
        %s406 = ssub.s32 0, %s404
        %s407 = scalar_select %p405, %s406, %s404
        %s408 = sshrl.u32 %s407, 3
        %s409 = ssub.s32 0, %s408
        %s410 = scalar_select %p405, %s409, %s408
        // While loop
        $region44: #{tpu_custom_call.1} parent=31 // loop_pre_header
          _
        $region45: #{tpu_custom_call.1} parent=31 // loop_header
          %s412 = sphi 0, %s414
          %p413 = scmp.ge.s32.totalorder %s412, %s410
          %v417 = vphi %v365, %v914
          %v418 = vphi %v369, %v915
        $region46: #{tpu_custom_call.1} parent=31 // loop_header_branch
          %416 = sbr.rel (%p413) target = $region50
        $region47: #{tpu_custom_call.1} parent=31 // loop_body
          %s419 = smul.u32 %s412, 8
          %s420 = sadd.s32 %s419, 1
          %p421 = scmp.lt.s32.totalorder %s420, 23
          %s422 = scalar_select %p421, %s420, 23
          %s423 = smul.u32 %s422, 8
          %s424 = scalar_lea.vmem %s191, %s423 [#allocation5]
          %v425 = vld [vmem:[%s424] sm:$0xff]
          %s426 = scalar_lea.vmem [#allocation2], %s423
          %v427 = vld [vmem:[%s426] sm:$0xff]
          %429 = vset.pattern.permute.xlu0 0
          %430 = vperm.xlu0 %429, %v427
          %v431 = vpop.permute.xlu0 %430
          %v433 = vsub.f32 %v425, %v431
          %v434 = vmax.f32 %v417, %v418
          %v435 = vsub.f32 %v417, %v418
          %v436 = vand.u32 2147483647, %v435
          %v437 = vsub.f32 0.0, %v436
          %v438 = vmul.f32 %v437, 1.442695
          %v439 = vpow.pop %v438
          %v440 = vadd.f32 %v439, 1.0
          %v441 = vlog2.pop %v440
          %v442 = vmul.f32 %v441, 0.6931472
          %v443 = vadd.f32 %v434, %v442
          %445 = vset.pattern.permute.xlu0 0
          %446 = vperm.xlu0 %445, %v433
          %v447 = vpop.permute.xlu0 %446
          %v449 = vadd.f32 %v443, %v447
          %450 = vrot.lane.b32.xlu0 %v417, 1
          %v451 = vpop.permute.xlu0 %450
          %v452 = vsel %vm364, -1e+30, %v451
          %453 = vrot.lane.b32.xlu0 %v418, 1
          %v454 = vpop.permute.xlu0 %453
          %v455 = vsel %vm364, -1e+30, %v454
          %v456 = vmax.f32 %v418, %v452
          %v457 = vmax.f32 %v456, %v455
          %v458 = vsub.f32 %v418, %v457
          %v459 = vmul.f32 %v458, 1.442695
          %v460 = vpow.pop %v459
          %v461 = vsub.f32 %v452, %v457
          %v462 = vmul.f32 %v461, 1.442695
          %v463 = vpow.pop %v462
          %v464 = vadd.f32 %v460, %v463
          %v465 = vsub.f32 %v455, %v457
          %v466 = vmul.f32 %v465, 1.442695
          %v467 = vpow.pop %v466
          %v468 = vadd.f32 %v464, %v467
          %v469 = vlog2.pop %v468
          %v470 = vmul.f32 %v469, 0.6931472
          %v471 = vadd.f32 %v457, %v470
          %v472 = vadd.f32 %v471, %v433
          %v473 = vstv %s420
          %vm474 = vcmp.lt.s32.totalorder %v473, %v232
          %v475 = vsel %vm474, 1, 0
          %476 = vset.pattern.permute.xlu0 0
          %477 = vperm.xlu0 %476, %v475
          %v478 = vpop.permute.xlu0 %477
          %vm479 = vcmp.eq.s32.totalorder %v478, 1
          %v480 = vsel %vm479, %v449, %v417
          %v481 = vsel %vm479, %v472, %v418
          %s482 = sadd.s32 %s419, 2
          %p483 = scmp.lt.s32.totalorder %s482, 23
          %s484 = scalar_select %p483, %s482, 23
          %s485 = smul.u32 %s484, 8
          %s486 = scalar_lea.vmem %s191, %s485 [#allocation5]
          %v487 = vld [vmem:[%s486] sm:$0xff]
          %s488 = scalar_lea.vmem [#allocation2], %s485
          %v489 = vld [vmem:[%s488] sm:$0xff]
          %491 = vset.pattern.permute.xlu0 0
          %492 = vperm.xlu0 %491, %v489
          %v493 = vpop.permute.xlu0 %492
          %v495 = vsub.f32 %v487, %v493
          %v496 = vmax.f32 %v480, %v481
          %v497 = vsub.f32 %v480, %v481
          %v498 = vand.u32 2147483647, %v497
          %v499 = vsub.f32 0.0, %v498
          %v500 = vmul.f32 %v499, 1.442695
          %v501 = vpow.pop %v500
          %v502 = vadd.f32 %v501, 1.0
          %v503 = vlog2.pop %v502
          %v504 = vmul.f32 %v503, 0.6931472
          %v505 = vadd.f32 %v496, %v504
          %507 = vset.pattern.permute.xlu0 0
          %508 = vperm.xlu0 %507, %v495
          %v509 = vpop.permute.xlu0 %508
          %v511 = vadd.f32 %v505, %v509
          %512 = vrot.lane.b32.xlu0 %v480, 1
          %v513 = vpop.permute.xlu0 %512
          %v514 = vsel %vm364, -1e+30, %v513
          %515 = vrot.lane.b32.xlu0 %v481, 1
          %v516 = vpop.permute.xlu0 %515
          %v517 = vsel %vm364, -1e+30, %v516
          %v518 = vmax.f32 %v481, %v514
          %v519 = vmax.f32 %v518, %v517
          %v520 = vsub.f32 %v481, %v519
          %v521 = vmul.f32 %v520, 1.442695
          %v522 = vpow.pop %v521
          %v523 = vsub.f32 %v514, %v519
          %v524 = vmul.f32 %v523, 1.442695
          %v525 = vpow.pop %v524
          %v526 = vadd.f32 %v522, %v525
          %v527 = vsub.f32 %v517, %v519
          %v528 = vmul.f32 %v527, 1.442695
          %v529 = vpow.pop %v528
          %v530 = vadd.f32 %v526, %v529
          %v531 = vlog2.pop %v530
          %v532 = vmul.f32 %v531, 0.6931472
          %v533 = vadd.f32 %v519, %v532
          %v534 = vadd.f32 %v533, %v495
          %v535 = vstv %s482
          %vm536 = vcmp.lt.s32.totalorder %v535, %v232
          %v537 = vsel %vm536, 1, 0
          %538 = vset.pattern.permute.xlu0 0
          %539 = vperm.xlu0 %538, %v537
          %v540 = vpop.permute.xlu0 %539
          %vm541 = vcmp.eq.s32.totalorder %v540, 1
          %v542 = vsel %vm541, %v511, %v480
          %v543 = vsel %vm541, %v534, %v481
          %s544 = sadd.s32 %s419, 3
          %p545 = scmp.lt.s32.totalorder %s544, 23
          %s546 = scalar_select %p545, %s544, 23
          %s547 = smul.u32 %s546, 8
          %s548 = scalar_lea.vmem %s191, %s547 [#allocation5]
          %v549 = vld [vmem:[%s548] sm:$0xff]
          %s550 = scalar_lea.vmem [#allocation2], %s547
          %v551 = vld [vmem:[%s550] sm:$0xff]
          %553 = vset.pattern.permute.xlu0 0
          %554 = vperm.xlu0 %553, %v551
          %v555 = vpop.permute.xlu0 %554
          %v557 = vsub.f32 %v549, %v555
          %v558 = vmax.f32 %v542, %v543
          %v559 = vsub.f32 %v542, %v543
          %v560 = vand.u32 2147483647, %v559
          %v561 = vsub.f32 0.0, %v560
          %v562 = vmul.f32 %v561, 1.442695
          %v563 = vpow.pop %v562
          %v564 = vadd.f32 %v563, 1.0
          %v565 = vlog2.pop %v564
          %v566 = vmul.f32 %v565, 0.6931472
          %v567 = vadd.f32 %v558, %v566
          %569 = vset.pattern.permute.xlu0 0
          %570 = vperm.xlu0 %569, %v557
          %v571 = vpop.permute.xlu0 %570
          %v573 = vadd.f32 %v567, %v571
          %574 = vrot.lane.b32.xlu0 %v542, 1
          %v575 = vpop.permute.xlu0 %574
          %v576 = vsel %vm364, -1e+30, %v575
          %577 = vrot.lane.b32.xlu0 %v543, 1
          %v578 = vpop.permute.xlu0 %577
          %v579 = vsel %vm364, -1e+30, %v578
          %v580 = vmax.f32 %v543, %v576
          %v581 = vmax.f32 %v580, %v579
          %v582 = vsub.f32 %v543, %v581
          %v583 = vmul.f32 %v582, 1.442695
          %v584 = vpow.pop %v583
          %v585 = vsub.f32 %v576, %v581
          %v586 = vmul.f32 %v585, 1.442695
          %v587 = vpow.pop %v586
          %v588 = vadd.f32 %v584, %v587
          %v589 = vsub.f32 %v579, %v581
          %v590 = vmul.f32 %v589, 1.442695
          %v591 = vpow.pop %v590
          %v592 = vadd.f32 %v588, %v591
          %v593 = vlog2.pop %v592
          %v594 = vmul.f32 %v593, 0.6931472
          %v595 = vadd.f32 %v581, %v594
          %v596 = vadd.f32 %v595, %v557
          %v597 = vstv %s544
          %vm598 = vcmp.lt.s32.totalorder %v597, %v232
          %v599 = vsel %vm598, 1, 0
          %600 = vset.pattern.permute.xlu0 0
          %601 = vperm.xlu0 %600, %v599
          %v602 = vpop.permute.xlu0 %601
          %vm603 = vcmp.eq.s32.totalorder %v602, 1
          %v604 = vsel %vm603, %v573, %v542
          %v605 = vsel %vm603, %v596, %v543
          %s606 = sadd.s32 %s419, 4
          %p607 = scmp.lt.s32.totalorder %s606, 23
          %s608 = scalar_select %p607, %s606, 23
          %s609 = smul.u32 %s608, 8
          %s610 = scalar_lea.vmem %s191, %s609 [#allocation5]
          %v611 = vld [vmem:[%s610] sm:$0xff]
          %s612 = scalar_lea.vmem [#allocation2], %s609
          %v613 = vld [vmem:[%s612] sm:$0xff]
          %615 = vset.pattern.permute.xlu0 0
          %616 = vperm.xlu0 %615, %v613
          %v617 = vpop.permute.xlu0 %616
          %v619 = vsub.f32 %v611, %v617
          %v620 = vmax.f32 %v604, %v605
          %v621 = vsub.f32 %v604, %v605
          %v622 = vand.u32 2147483647, %v621
          %v623 = vsub.f32 0.0, %v622
          %v624 = vmul.f32 %v623, 1.442695
          %v625 = vpow.pop %v624
          %v626 = vadd.f32 %v625, 1.0
          %v627 = vlog2.pop %v626
          %v628 = vmul.f32 %v627, 0.6931472
          %v629 = vadd.f32 %v620, %v628
          %631 = vset.pattern.permute.xlu0 0
          %632 = vperm.xlu0 %631, %v619
          %v633 = vpop.permute.xlu0 %632
          %v635 = vadd.f32 %v629, %v633
          %636 = vrot.lane.b32.xlu0 %v604, 1
          %v637 = vpop.permute.xlu0 %636
          %v638 = vsel %vm364, -1e+30, %v637
          %639 = vrot.lane.b32.xlu0 %v605, 1
          %v640 = vpop.permute.xlu0 %639
          %v641 = vsel %vm364, -1e+30, %v640
          %v642 = vmax.f32 %v605, %v638
          %v643 = vmax.f32 %v642, %v641
          %v644 = vsub.f32 %v605, %v643
          %v645 = vmul.f32 %v644, 1.442695
          %v646 = vpow.pop %v645
          %v647 = vsub.f32 %v638, %v643
          %v648 = vmul.f32 %v647, 1.442695
          %v649 = vpow.pop %v648
          %v650 = vadd.f32 %v646, %v649
          %v651 = vsub.f32 %v641, %v643
          %v652 = vmul.f32 %v651, 1.442695
          %v653 = vpow.pop %v652
          %v654 = vadd.f32 %v650, %v653
          %v655 = vlog2.pop %v654
          %v656 = vmul.f32 %v655, 0.6931472
          %v657 = vadd.f32 %v643, %v656
          %v658 = vadd.f32 %v657, %v619
          %v659 = vstv %s606
          %vm660 = vcmp.lt.s32.totalorder %v659, %v232
          %v661 = vsel %vm660, 1, 0
          %662 = vset.pattern.permute.xlu0 0
          %663 = vperm.xlu0 %662, %v661
          %v664 = vpop.permute.xlu0 %663
          %vm665 = vcmp.eq.s32.totalorder %v664, 1
          %v666 = vsel %vm665, %v635, %v604
          %v667 = vsel %vm665, %v658, %v605
          %s668 = sadd.s32 %s419, 5
          %p669 = scmp.lt.s32.totalorder %s668, 23
          %s670 = scalar_select %p669, %s668, 23
          %s671 = smul.u32 %s670, 8
          %s672 = scalar_lea.vmem %s191, %s671 [#allocation5]
          %v673 = vld [vmem:[%s672] sm:$0xff]
          %s674 = scalar_lea.vmem [#allocation2], %s671
          %v675 = vld [vmem:[%s674] sm:$0xff]
          %677 = vset.pattern.permute.xlu0 0
          %678 = vperm.xlu0 %677, %v675
          %v679 = vpop.permute.xlu0 %678
          %v681 = vsub.f32 %v673, %v679
          %v682 = vmax.f32 %v666, %v667
          %v683 = vsub.f32 %v666, %v667
          %v684 = vand.u32 2147483647, %v683
          %v685 = vsub.f32 0.0, %v684
          %v686 = vmul.f32 %v685, 1.442695
          %v687 = vpow.pop %v686
          %v688 = vadd.f32 %v687, 1.0
          %v689 = vlog2.pop %v688
          %v690 = vmul.f32 %v689, 0.6931472
          %v691 = vadd.f32 %v682, %v690
          %693 = vset.pattern.permute.xlu0 0
          %694 = vperm.xlu0 %693, %v681
          %v695 = vpop.permute.xlu0 %694
          %v697 = vadd.f32 %v691, %v695
          %698 = vrot.lane.b32.xlu0 %v666, 1
          %v699 = vpop.permute.xlu0 %698
          %v700 = vsel %vm364, -1e+30, %v699
          %701 = vrot.lane.b32.xlu0 %v667, 1
          %v702 = vpop.permute.xlu0 %701
          %v703 = vsel %vm364, -1e+30, %v702
          %v704 = vmax.f32 %v667, %v700
          %v705 = vmax.f32 %v704, %v703
          %v706 = vsub.f32 %v667, %v705
          %v707 = vmul.f32 %v706, 1.442695
          %v708 = vpow.pop %v707
          %v709 = vsub.f32 %v700, %v705
          %v710 = vmul.f32 %v709, 1.442695
          %v711 = vpow.pop %v710
          %v712 = vadd.f32 %v708, %v711
          %v713 = vsub.f32 %v703, %v705
          %v714 = vmul.f32 %v713, 1.442695
          %v715 = vpow.pop %v714
          %v716 = vadd.f32 %v712, %v715
          %v717 = vlog2.pop %v716
          %v718 = vmul.f32 %v717, 0.6931472
          %v719 = vadd.f32 %v705, %v718
          %v720 = vadd.f32 %v719, %v681
          %v721 = vstv %s668
          %vm722 = vcmp.lt.s32.totalorder %v721, %v232
          %v723 = vsel %vm722, 1, 0
          %724 = vset.pattern.permute.xlu0 0
          %725 = vperm.xlu0 %724, %v723
          %v726 = vpop.permute.xlu0 %725
          %vm727 = vcmp.eq.s32.totalorder %v726, 1
          %v728 = vsel %vm727, %v697, %v666
          %v729 = vsel %vm727, %v720, %v667
          %s730 = sadd.s32 %s419, 6
          %p731 = scmp.lt.s32.totalorder %s730, 23
          %s732 = scalar_select %p731, %s730, 23
          %s733 = smul.u32 %s732, 8
          %s734 = scalar_lea.vmem %s191, %s733 [#allocation5]
          %v735 = vld [vmem:[%s734] sm:$0xff]
          %s736 = scalar_lea.vmem [#allocation2], %s733
          %v737 = vld [vmem:[%s736] sm:$0xff]
          %739 = vset.pattern.permute.xlu0 0
          %740 = vperm.xlu0 %739, %v737
          %v741 = vpop.permute.xlu0 %740
          %v743 = vsub.f32 %v735, %v741
          %v744 = vmax.f32 %v728, %v729
          %v745 = vsub.f32 %v728, %v729
          %v746 = vand.u32 2147483647, %v745
          %v747 = vsub.f32 0.0, %v746
          %v748 = vmul.f32 %v747, 1.442695
          %v749 = vpow.pop %v748
          %v750 = vadd.f32 %v749, 1.0
          %v751 = vlog2.pop %v750
          %v752 = vmul.f32 %v751, 0.6931472
          %v753 = vadd.f32 %v744, %v752
          %755 = vset.pattern.permute.xlu0 0
          %756 = vperm.xlu0 %755, %v743
          %v757 = vpop.permute.xlu0 %756
          %v759 = vadd.f32 %v753, %v757
          %760 = vrot.lane.b32.xlu0 %v728, 1
          %v761 = vpop.permute.xlu0 %760
          %v762 = vsel %vm364, -1e+30, %v761
          %763 = vrot.lane.b32.xlu0 %v729, 1
          %v764 = vpop.permute.xlu0 %763
          %v765 = vsel %vm364, -1e+30, %v764
          %v766 = vmax.f32 %v729, %v762
          %v767 = vmax.f32 %v766, %v765
          %v768 = vsub.f32 %v729, %v767
          %v769 = vmul.f32 %v768, 1.442695
          %v770 = vpow.pop %v769
          %v771 = vsub.f32 %v762, %v767
          %v772 = vmul.f32 %v771, 1.442695
          %v773 = vpow.pop %v772
          %v774 = vadd.f32 %v770, %v773
          %v775 = vsub.f32 %v765, %v767
          %v776 = vmul.f32 %v775, 1.442695
          %v777 = vpow.pop %v776
          %v778 = vadd.f32 %v774, %v777
          %v779 = vlog2.pop %v778
          %v780 = vmul.f32 %v779, 0.6931472
          %v781 = vadd.f32 %v767, %v780
          %v782 = vadd.f32 %v781, %v743
          %v783 = vstv %s730
          %vm784 = vcmp.lt.s32.totalorder %v783, %v232
          %v785 = vsel %vm784, 1, 0
          %786 = vset.pattern.permute.xlu0 0
          %787 = vperm.xlu0 %786, %v785
          %v788 = vpop.permute.xlu0 %787
          %vm789 = vcmp.eq.s32.totalorder %v788, 1
          %v790 = vsel %vm789, %v759, %v728
          %v791 = vsel %vm789, %v782, %v729
          %s792 = sadd.s32 %s419, 7
          %p793 = scmp.lt.s32.totalorder %s792, 23
          %s794 = scalar_select %p793, %s792, 23
          %s795 = smul.u32 %s794, 8
          %s796 = scalar_lea.vmem %s191, %s795 [#allocation5]
          %v797 = vld [vmem:[%s796] sm:$0xff]
          %s798 = scalar_lea.vmem [#allocation2], %s795
          %v799 = vld [vmem:[%s798] sm:$0xff]
          %801 = vset.pattern.permute.xlu0 0
          %802 = vperm.xlu0 %801, %v799
          %v803 = vpop.permute.xlu0 %802
          %v805 = vsub.f32 %v797, %v803
          %v806 = vmax.f32 %v790, %v791
          %v807 = vsub.f32 %v790, %v791
          %v808 = vand.u32 2147483647, %v807
          %v809 = vsub.f32 0.0, %v808
          %v810 = vmul.f32 %v809, 1.442695
          %v811 = vpow.pop %v810
          %v812 = vadd.f32 %v811, 1.0
          %v813 = vlog2.pop %v812
          %v814 = vmul.f32 %v813, 0.6931472
          %v815 = vadd.f32 %v806, %v814
          %817 = vset.pattern.permute.xlu0 0
          %818 = vperm.xlu0 %817, %v805
          %v819 = vpop.permute.xlu0 %818
          %v821 = vadd.f32 %v815, %v819
          %822 = vrot.lane.b32.xlu0 %v790, 1
          %v823 = vpop.permute.xlu0 %822
          %v824 = vsel %vm364, -1e+30, %v823
          %825 = vrot.lane.b32.xlu0 %v791, 1
          %v826 = vpop.permute.xlu0 %825
          %v827 = vsel %vm364, -1e+30, %v826
          %v828 = vmax.f32 %v791, %v824
          %v829 = vmax.f32 %v828, %v827
          %v830 = vsub.f32 %v791, %v829
          %v831 = vmul.f32 %v830, 1.442695
          %v832 = vpow.pop %v831
          %v833 = vsub.f32 %v824, %v829
          %v834 = vmul.f32 %v833, 1.442695
          %v835 = vpow.pop %v834
          %v836 = vadd.f32 %v832, %v835
          %v837 = vsub.f32 %v827, %v829
          %v838 = vmul.f32 %v837, 1.442695
          %v839 = vpow.pop %v838
          %v840 = vadd.f32 %v836, %v839
          %v841 = vlog2.pop %v840
          %v842 = vmul.f32 %v841, 0.6931472
          %v843 = vadd.f32 %v829, %v842
          %v844 = vadd.f32 %v843, %v805
          %v845 = vstv %s792
          %vm846 = vcmp.lt.s32.totalorder %v845, %v232
          %v847 = vsel %vm846, 1, 0
          %848 = vset.pattern.permute.xlu0 0
          %849 = vperm.xlu0 %848, %v847
          %v850 = vpop.permute.xlu0 %849
          %vm851 = vcmp.eq.s32.totalorder %v850, 1
          %v852 = vsel %vm851, %v821, %v790
          %v853 = vsel %vm851, %v844, %v791
          %s854 = sadd.s32 %s419, 8
          %p855 = scmp.lt.s32.totalorder %s854, 23
          %s856 = scalar_select %p855, %s854, 23
          %s857 = smul.u32 %s856, 8
          %s858 = scalar_lea.vmem %s191, %s857 [#allocation5]
          %v859 = vld [vmem:[%s858] sm:$0xff]
          %s860 = scalar_lea.vmem [#allocation2], %s857
          %v861 = vld [vmem:[%s860] sm:$0xff]
          %863 = vset.pattern.permute.xlu0 0
          %864 = vperm.xlu0 %863, %v861
          %v865 = vpop.permute.xlu0 %864
          %v867 = vsub.f32 %v859, %v865
          %v868 = vmax.f32 %v852, %v853
          %v869 = vsub.f32 %v852, %v853
          %v870 = vand.u32 2147483647, %v869
          %v871 = vsub.f32 0.0, %v870
          %v872 = vmul.f32 %v871, 1.442695
          %v873 = vpow.pop %v872
          %v874 = vadd.f32 %v873, 1.0
          %v875 = vlog2.pop %v874
          %v876 = vmul.f32 %v875, 0.6931472
          %v877 = vadd.f32 %v868, %v876
          %879 = vset.pattern.permute.xlu0 0
          %880 = vperm.xlu0 %879, %v867
          %v881 = vpop.permute.xlu0 %880
          %v883 = vadd.f32 %v877, %v881
          %884 = vrot.lane.b32.xlu0 %v852, 1
          %v885 = vpop.permute.xlu0 %884
          %v886 = vsel %vm364, -1e+30, %v885
          %887 = vrot.lane.b32.xlu0 %v853, 1
          %v888 = vpop.permute.xlu0 %887
          %v889 = vsel %vm364, -1e+30, %v888
          %v890 = vmax.f32 %v853, %v886
          %v891 = vmax.f32 %v890, %v889
          %v892 = vsub.f32 %v853, %v891
          %v893 = vmul.f32 %v892, 1.442695
          %v894 = vpow.pop %v893
          %v895 = vsub.f32 %v886, %v891
          %v896 = vmul.f32 %v895, 1.442695
          %v897 = vpow.pop %v896
          %v898 = vadd.f32 %v894, %v897
          %v899 = vsub.f32 %v889, %v891
          %v900 = vmul.f32 %v899, 1.442695
          %v901 = vpow.pop %v900
          %v902 = vadd.f32 %v898, %v901
          %v903 = vlog2.pop %v902
          %v904 = vmul.f32 %v903, 0.6931472
          %v905 = vadd.f32 %v891, %v904
          %v906 = vadd.f32 %v905, %v867
          %v907 = vstv %s854
          %vm908 = vcmp.lt.s32.totalorder %v907, %v232
          %v909 = vsel %vm908, 1, 0
          %910 = vset.pattern.permute.xlu0 0
          %911 = vperm.xlu0 %910, %v909
          %v912 = vpop.permute.xlu0 %911
          %vm913 = vcmp.eq.s32.totalorder %v912, 1
          %v914 = vsel %vm913, %v883, %v852
          %v915 = vsel %vm913, %v906, %v853
        $region48: #{tpu_custom_call.1} parent=31 // loop_footer
          %s414 = sadd.s32 %s412, 1
        $region49: #{tpu_custom_call.1} parent=31 // loop_footer_branch
          %411 = sbr.rel target = $region45
        $region50: #{tpu_custom_call.1} parent=31 // loop_exit
          _
        %916 = vset.pattern.permute.xlu0 0
        %917 = vperm.xlu0 %916, %v231
        %v918 = vpop.permute.xlu0 %917
        %vm919 = vcmp.eq.s32.totalorder %v234, %v918
        %v920 = vsel %vm919, %v417, -1e+30
        %921 = vmax.xlane.f32.xlu0 %v920
        %v922 = vpop.xlane.xlu0 %921
        %v923 = vsel %vm919, %v418, -1e+30
        %924 = vmax.xlane.f32.xlu0 %v923
        %v925 = vpop.xlane.xlu0 %924
        %v926 = vmax.f32 %v922, %v925
        %v927 = vsub.f32 %v922, %v925
        %v928 = vand.u32 2147483647, %v927
        %v929 = vsub.f32 0.0, %v928
        %v930 = vmul.f32 %v929, 1.442695
        %v931 = vpow.pop %v930
        %v932 = vadd.f32 %v931, 1.0
        %v933 = vlog2.pop %v932
        %v934 = vmul.f32 %v933, 0.6931472
        %v935 = vadd.f32 %v926, %v934
        %v936 = vsub.f32 0.0, %v935
        %vm937 = vcmp.lt.f32.partialorder %v936, 1e+29
        %v938 = vsel %vm937, %v936, 0.0
        %vm939 = vcmp.gt.s32.totalorder %v231, 0
        %vm940 = vcmp.gt.s32.totalorder %v232, 0
        %vm941 = vmand %vm939, %vm940
        %vm942 = vcmp.gt.s32.totalorder %v231, 1
        %v943 = vsel %vm942, %v231, 1
        %v944 = vcvt.s32.f32 %v943
        %v945 = vrcp.pop %v944
        %v946 = vmul.f32 %v938, %v945
        %v947 = vsel %vm941, %v946, 0.0
        %949 = vset.pattern.permute.xlu0 0
        %950 = vperm.xlu0 %949, %v947
        %v951 = vpop.permute.xlu0 %950
        %953 = vst [vmem:[%s221] sm:$0xff] %v951
        %s954 = sand.u32 %s113, 1
        %s955 = scalar_lea.sflag [#allocation7], %s954
        %s956 = sand.u32 %s113, 1
        %s957 = smul.addr %s956, 8
        %s958 = scalar_lea.vmem [#allocation8], %s957
        // Predicated region
        $region51: #{tpu_custom_call.1} parent=31 // pred_check
          %p959 = pneg %p123
        $region52: #{tpu_custom_call.1} parent=31 // pred_check_branch
          %961 = sbr.rel (%p959) target = $region54
        $region53: #{tpu_custom_call.1} parent=31 // pred_region
          %s963 = ssub.s32 128, 128
          %964 = vsyncadd %s955, %s963
          %s965 = smul.addr %s27, 128
          %s966 = scalar_lea.hbm %s4, %s965
          %s968 = sshll.u32 %s958, 4
          %s969 = int_to_ptr.vmem [resolvable:$true] %s968
          %971 = dma.vmem_to_hbm [thread:$0]  %s969, 128, %s966, %s955
        $region54: #{tpu_custom_call.1} parent=31 // pred_fallthru
          _
      $region32: #{tpu_custom_call.1} parent=5 // pred_fallthru
        _
      %p972 = scmp.le.s32.totalorder 2, %s22
      // Predicated region
      $region55: #{tpu_custom_call.1} parent=5 // pred_check
        %p973 = pneg %p972
      $region56: #{tpu_custom_call.1} parent=5 // pred_check_branch
        %975 = sbr.rel (%p973) target = $region58
      $region57: #{tpu_custom_call.1} parent=5 // pred_region
        %s976 = ssub.s32 %s22, 2
        // Predicated region
        $region59: #{tpu_custom_call.1} parent=57 // pred_check
          %p977 = pneg %p129
        $region60: #{tpu_custom_call.1} parent=57 // pred_check_branch
          %979 = sbr.rel (%p977) target = $region62
        $region61: #{tpu_custom_call.1} parent=57 // pred_region
          %s980 = sand.u32 %s114, 1
          %s981 = scalar_lea.sflag [#allocation7], %s980
          %s982 = sand.u32 %s114, 1
          %s983 = smul.addr %s982, 8
          %s984 = scalar_lea.vmem [#allocation8], %s983
          %985 = dma.done %s981, 128
        $region62: #{tpu_custom_call.1} parent=57 // pred_fallthru
          _
      $region58: #{tpu_custom_call.1} parent=5 // pred_fallthru
        _
    $region6: #{tpu_custom_call.1} parent=1 // loop_footer
      %s26 = sadd.s32 1, %s22
    $region7: #{tpu_custom_call.1} parent=1 // loop_footer_branch
      %21 = sbr.rel target = $region3
    $region8: #{tpu_custom_call.1} parent=1 // loop_exit
      _
    %986 = vsyncpa [#allocation6], 1
    %s987 = scalar_lea.sflag [#allocation6], 1
    %988 = vsyncpa %s987, 1
    %989 = vsyncpa [#allocation7], 1
    %s990 = scalar_lea.sflag [#allocation7], 1
    %991 = vsyncpa %s990, 1

</llo_original>
